<compile_context>
chip_gen: v7x
topology: tpu7x:2x2x1
jax: 0.10.0
libtpu: 0.0.40
codegen_flags: <defaults>
</compile_context>

<pallas_src>
import numpy as np

import jax
import jax.numpy as jnp
from jax.experimental import pallas as pl
from jax.experimental.pallas import tpu as pltpu


# ----------------------------- in-kernel helpers -----------------------------
# All helpers operate on values laid out as (C, H*W): channels on sublanes and
# the flattened spatial axis on lanes (lane-dense for H*W >= 128).


def _shift_flat(x, off, fill):
    """out[:, p] = x[:, p + off]; positions that fall off the array get `fill`."""
    if off == 0:
        return x
    c = x.shape[0]
    pad = jnp.full((c, abs(off)), fill, dtype=x.dtype)
    if off > 0:
        return jnp.concatenate([x[:, off:], pad], axis=1)
    return jnp.concatenate([pad, x[:, :off]], axis=1)


def _dw3x3_bn(x, w, b, H, W, relu_in):
    """3x3 depthwise conv (SAME, stride 1) + folded BN on a (C, H*W) slab.

    w: (C, 9) depthwise taps with the BN scale pre-folded, tap t = (dy+1)*3+(dx+1).
    b: (C, 1) folded BN shift.
    """
    if relu_in:
        x = jnp.maximum(x, 0.0)
    HW = H * W
    col = jax.lax.broadcasted_iota(jnp.int32, (1, HW), 1) % W
    # Column-shifted taps (dx = -1 / +1), boundary columns zeroed once here; the
    # row (dy) shifts below preserve column positions so the mask stays valid.
    xl = jnp.where(col > 0, _shift_flat(x, -1, 0.0), 0.0)
    xr = jnp.where(col < W - 1, _shift_flat(x, 1, 0.0), 0.0)
    cols = (xl, x, xr)                                   # indexed by dx + 1

    acc = x * w[:, 4:5] + b                              # centre tap + BN shift
    for dy in (-1, 0, 1):
        for dx in (-1, 0, 1):
            if dy == 0 and dx == 0:
                continue
            t = (dy + 1) * 3 + (dx + 1)
            base = cols[dx + 1]
            tap = base if dy == 0 else _shift_flat(base, dy * W, 0.0)
            acc = acc + tap * w[:, t:t + 1]
    return acc


def _pw_bn(x, w, b, relu_out):
    """1x1 conv + folded BN: (Cout, Cin) @ (Cin, H*W) on the MXU (lane-dense out)."""
    y = jnp.dot(w, x, preferred_element_type=jnp.float32) + b
    return jnp.maximum(y, 0.0) if relu_out else y


def _maxpool3x3_dense(x, H, W):
    """Dense 3x3 / stride-1 / pad-1 max on a (C, H*W) slab (decimation by caller)."""
    HW = H * W
    col = jax.lax.broadcasted_iota(jnp.int32, (1, HW), 1) % W
    neg = jnp.float32(-jnp.inf)
    left = jnp.where(col > 0, _shift_flat(x, -1, neg), neg)
    right = jnp.where(col < W - 1, _shift_flat(x, 1, neg), neg)
    m1 = jnp.maximum(jnp.maximum(left, right), x)        # finite (contains centre)
    up = _shift_flat(m1, -W, neg)
    down = _shift_flat(m1, W, neg)
    return jnp.maximum(jnp.maximum(up, down), m1)


# ---------------------------------- wrapper -----------------------------------

def exit_flow_forward(x_nchw, params):
    x = x_nchw.astype(jnp.float32)
    N, Cin, H, W = x.shape
    assert H % 2 == 0 and W % 2 == 0
    H2, W2 = H // 2, W // 2
    HW, HW2 = H * W, H2 * W2
    C1 = params["conv2"]["pw_w"].shape[1]
    C3 = params["conv4"]["pw_w"].shape[1]

    x_flat = x.reshape(N, Cin, HW)                       # NCHW is already (C, H*W)

    # Constant stride-2 decimation matrix:
    # (m @ dec)[c, q] = m[c, 2*(q // W2) * W + 2*(q % W2)]
    q = jnp.arange(HW2, dtype=jnp.int32)
    sel = 2 * (q // W2) * W + 2 * (q % W2)
    dec = (jnp.arange(HW, dtype=jnp.int32)[:, None] == sel[None, :]).astype(jnp.float32)

    def fold_sep(p):
        cin = p["dw_w"].shape[-1]
        cout = p["pw_w"].shape[1]
        dw = (p["dw_w"] * p["dw_sc"][None, None, :]).transpose(2, 0, 1).reshape(cin, 9)
        pw = (p["pw_w"] * p["pw_sc"][None, :]).T          # (Cout, Cin), scale folded
        return [dw, p["dw_sh"].reshape(cin, 1), pw, p["pw_sh"].reshape(cout, 1)]

    cs_w = (params["conv2s_w"] * params["conv2s_sc"][None, :]).T
    cs_b = params["conv2s_sh"].reshape(C1, 1)

    weights = (fold_sep(params["conv1"]) + fold_sep(params["conv2"])
               + [cs_w, cs_b]
               + fold_sep(params["conv3"]) + fold_sep(params["conv4"]))

    def kernel(x_ref, dec_ref,
               dw1_w, dw1_b, pw1_w, pw1_b,
               dw2_w, dw2_b, pw2_w, pw2_b,
               c2s_w, c2s_b,
               dw3_w, dw3_b, pw3_w, pw3_b,
               dw4_w, dw4_b, pw4_w, pw4_b,
               o_ref):
        xin = x_ref[0]                                   # (Cin, H*W) raw input
        dcm = dec_ref[...]                               # (H*W, H2*W2)

        # Stride-2 shortcut input, hoisted so the raw input's live range is short.
        xs = jnp.dot(xin, dcm, preferred_element_type=jnp.float32)   # (Cin, H2*W2)

        # conv1 = SepConv(relu(x)); conv2 = SepConv(relu(x1))
        h = _dw3x3_bn(xin, dw1_w[...], dw1_b[...], H, W, relu_in=True)
        x1 = _pw_bn(h, pw1_w[...], pw1_b[...], relu_out=False)
        h = _dw3x3_bn(x1, dw2_w[...], dw2_b[...], H, W, relu_in=True)
        y2 = _pw_bn(h, pw2_w[...], pw2_b[...], relu_out=False)

        # 3x3 / stride-2 / pad-1 maxpool: dense 3x3 max, then one MXU decimation.
        pooled = jnp.dot(_maxpool3x3_dense(y2, H, W), dcm,
                         preferred_element_type=jnp.float32)          # (C1, H2*W2)

        # conv2s: 1x1 / stride-2 shortcut on the raw input + fused residual add.
        x2 = pooled + _pw_bn(xs, c2s_w[...], c2s_b[...], relu_out=False)

        # conv3 / conv4, each followed by relu.
        h = _dw3x3_bn(x2, dw3_w[...], dw3_b[...], H2, W2, relu_in=False)
        x3 = _pw_bn(h, pw3_w[...], pw3_b[...], relu_out=True)
        h = _dw3x3_bn(x3, dw4_w[...], dw4_b[...], H2, W2, relu_in=False)
        x4 = _pw_bn(h, pw4_w[...], pw4_b[...], relu_out=True)         # (C3, H2*W2)

        # Global average pool over the lane (spatial) axis.
        gap = jnp.sum(x4, axis=1, keepdims=True) * (1.0 / HW2)        # (C3, 1)
        o_ref[...] = gap.reshape(1, C3, 1)

    def full_spec(a):
        # Full-array 2-D block, constant index map -> never re-DMA'd across steps.
        return pl.BlockSpec(a.shape, lambda n: (0, 0))

    in_specs = ([pl.BlockSpec((1, Cin, HW), lambda n: (n, 0, 0)),
                 full_spec(dec)]
                + [full_spec(a) for a in weights])

    out = pl.pallas_call(
        kernel,
        out_shape=jax.ShapeDtypeStruct((N, C3, 1), jnp.float32),
        grid=(N,),
        in_specs=in_specs,
        out_specs=pl.BlockSpec((1, C3, 1), lambda n: (n, 0, 0)),
        compiler_params=pltpu.CompilerParams(
            dimension_semantics=("parallel",)),
    )(x_flat, dec, *weights)
    return out.reshape(N, C3)


# --------------------------- parameter creation -------------------------------

def fold_bn(key, c):
    k1, k2, k3, k4 = jax.random.split(key, 4)
    gamma = 1.0 + 0.1 * jax.random.normal(k1, (c,), jnp.float32)
    beta = 0.1 * jax.random.normal(k2, (c,), jnp.float32)
    mean = 0.1 * jax.random.normal(k3, (c,), jnp.float32)
    var = 1.0 + 0.1 * jax.random.uniform(k4, (c,), jnp.float32)
    scale = gamma / jnp.sqrt(var + 1e-5)
    shift = beta - mean * scale
    return scale, shift


def make_sepconv_params(key, cin, cout):
    k1, k2, k3, k4 = jax.random.split(key, 4)
    dw_sc, dw_sh = fold_bn(k2, cin)
    pw_sc, pw_sh = fold_bn(k4, cout)
    return dict(
        dw_w=0.2 * jax.random.normal(k1, (3, 3, cin), jnp.float32),
        dw_sc=dw_sc, dw_sh=dw_sh,
        pw_w=0.2 * jax.random.normal(k3, (cin, cout), jnp.float32),
        pw_sc=pw_sc, pw_sh=pw_sh,
    )


# ---------------------------------- reference ---------------------------------

def ref_forward(x_nchw, params):
    hp = jax.lax.Precision.HIGHEST
    x = jnp.transpose(x_nchw, (0, 2, 3, 1)).astype(jnp.float32)

    def dw(h, w, sc, sh, relu_in):
        if relu_in:
            h = jnp.maximum(h, 0.0)
        C = h.shape[-1]
        y = jax.lax.conv_general_dilated(
            h, w.reshape(3, 3, 1, C), (1, 1), "SAME",
            dimension_numbers=("NHWC", "HWIO", "NHWC"),
            feature_group_count=C, precision=hp)
        return y * sc + sh

    def pw(h, w, sc, sh, relu_out=False):
        y = jnp.einsum("nhwi,io->nhwo", h, w, precision=hp) * sc + sh
        return jnp.maximum(y, 0.0) if relu_out else y

    def sep(h, p, pre_relu=False, post_relu=False):
        y = dw(h, p["dw_w"], p["dw_sc"], p["dw_sh"], pre_relu)
        return pw(y, p["pw_w"], p["pw_sc"], p["pw_sh"], post_relu)

    x1 = sep(x, params["conv1"], pre_relu=True)
    x2 = sep(x1, params["conv2"], pre_relu=True)
    x2 = jax.lax.reduce_window(x2, -jnp.inf, jax.lax.max,
                               (1, 3, 3, 1), (1, 2, 2, 1),
                               [(0, 0), (1, 1), (1, 1), (0, 0)])
    x2s = pw(x[:, ::2, ::2, :], params["conv2s_w"],
             params["conv2s_sc"], params["conv2s_sh"])
    x2 = x2 + x2s
    x3 = sep(x2, params["conv3"], post_relu=True)
    x4 = sep(x3, params["conv4"], post_relu=True)
    return jnp.mean(x4, axis=(1, 2))


# ------------------------------------ main ------------------------------------

if __name__ == "__main__":
    key = jax.random.PRNGKey(0)
    in_channels = 4
    nchannels = [8, 8, 16, 16]
    N, H, W = 2, 16, 16

    kx, k1, k2, k2s, k3, k4 = jax.random.split(key, 6)
    x = jax.random.normal(kx, (N, in_channels, H, W), jnp.float32)  # NCHW (PyTorch-like)

    ka, kb = jax.random.split(k2s)
    params = {
        "conv1": make_sepconv_params(k1, in_channels, nchannels[0]),
        "conv2": make_sepconv_params(k2, nchannels[0], nchannels[1]),
        "conv3": make_sepconv_params(k3, nchannels[1], nchannels[2]),
        "conv4": make_sepconv_params(k4, nchannels[2], nchannels[3]),
        "conv2s_w": 0.2 * jax.random.normal(ka, (in_channels, nchannels[1]), jnp.float32),
    }
    params["conv2s_sc"], params["conv2s_sh"] = fold_bn(kb, nchannels[1])

    out = jax.block_until_ready(exit_flow_forward(x, params))
    ref = jax.block_until_ready(ref_forward(x, params))

    assert out.shape == (N, nchannels[3]), out.shape
    # Kernel matmuls run at default TPU matmul precision while the reference uses
    # Precision.HIGHEST -> allow bf16-level relative error.
    np.testing.assert_allclose(np.asarray(out), np.asarray(ref), rtol=2e-2, atol=2e-3)
    print("KERNEL_OK")
</pallas_src>

<mosaic_0001>
module attributes {stable_mosaic.version = 11 : i64} {
  func.func @kernel(%arg0: i32, %arg1: memref<1x4x256xf32, #tpu.memory_space<vmem>>, %arg2: memref<256x64xf32, #tpu.memory_space<vmem>>, %arg3: memref<4x9xf32, #tpu.memory_space<vmem>>, %arg4: memref<4x1xf32, #tpu.memory_space<vmem>>, %arg5: memref<8x4xf32, #tpu.memory_space<vmem>>, %arg6: memref<8x1xf32, #tpu.memory_space<vmem>>, %arg7: memref<8x9xf32, #tpu.memory_space<vmem>>, %arg8: memref<8x1xf32, #tpu.memory_space<vmem>>, %arg9: memref<8x8xf32, #tpu.memory_space<vmem>>, %arg10: memref<8x1xf32, #tpu.memory_space<vmem>>, %arg11: memref<8x4xf32, #tpu.memory_space<vmem>>, %arg12: memref<8x1xf32, #tpu.memory_space<vmem>>, %arg13: memref<8x9xf32, #tpu.memory_space<vmem>>, %arg14: memref<8x1xf32, #tpu.memory_space<vmem>>, %arg15: memref<16x8xf32, #tpu.memory_space<vmem>>, %arg16: memref<16x1xf32, #tpu.memory_space<vmem>>, %arg17: memref<16x9xf32, #tpu.memory_space<vmem>>, %arg18: memref<16x1xf32, #tpu.memory_space<vmem>>, %arg19: memref<16x16xf32, #tpu.memory_space<vmem>>, %arg20: memref<16x1xf32, #tpu.memory_space<vmem>>, %arg21: memref<1x16x1xf32, #tpu.memory_space<vmem>>) attributes {dimension_semantics = [#tpu.dimension_semantics<parallel>], iteration_bounds = array<i64: 2>, scalar_prefetch = 0 : i64, scratch_operands = 0 : i64, tpu.core_type = #tpu.core_type<tc>, window_params = [{transform_indices = @transform_0, window_bounds = array<i64: 1, 4, 256>}, {pipeline_mode = #tpu.pipeline_mode<synchronous>, transform_indices = @transform_1, window_bounds = array<i64: 256, 64>}, {pipeline_mode = #tpu.pipeline_mode<synchronous>, transform_indices = @transform_2, window_bounds = array<i64: 4, 9>}, {pipeline_mode = #tpu.pipeline_mode<synchronous>, transform_indices = @transform_3, window_bounds = array<i64: 4, 1>}, {pipeline_mode = #tpu.pipeline_mode<synchronous>, transform_indices = @transform_4, window_bounds = array<i64: 8, 4>}, {pipeline_mode = #tpu.pipeline_mode<synchronous>, transform_indices = @transform_5, window_bounds = array<i64: 8, 1>}, {pipeline_mode = #tpu.pipeline_mode<synchronous>, transform_indices = @transform_6, window_bounds = array<i64: 8, 9>}, {pipeline_mode = #tpu.pipeline_mode<synchronous>, transform_indices = @transform_7, window_bounds = array<i64: 8, 1>}, {pipeline_mode = #tpu.pipeline_mode<synchronous>, transform_indices = @transform_8, window_bounds = array<i64: 8, 8>}, {pipeline_mode = #tpu.pipeline_mode<synchronous>, transform_indices = @transform_9, window_bounds = array<i64: 8, 1>}, {pipeline_mode = #tpu.pipeline_mode<synchronous>, transform_indices = @transform_10, window_bounds = array<i64: 8, 4>}, {pipeline_mode = #tpu.pipeline_mode<synchronous>, transform_indices = @transform_11, window_bounds = array<i64: 8, 1>}, {pipeline_mode = #tpu.pipeline_mode<synchronous>, transform_indices = @transform_12, window_bounds = array<i64: 8, 9>}, {pipeline_mode = #tpu.pipeline_mode<synchronous>, transform_indices = @transform_13, window_bounds = array<i64: 8, 1>}, {pipeline_mode = #tpu.pipeline_mode<synchronous>, transform_indices = @transform_14, window_bounds = array<i64: 16, 8>}, {pipeline_mode = #tpu.pipeline_mode<synchronous>, transform_indices = @transform_15, window_bounds = array<i64: 16, 1>}, {pipeline_mode = #tpu.pipeline_mode<synchronous>, transform_indices = @transform_16, window_bounds = array<i64: 16, 9>}, {pipeline_mode = #tpu.pipeline_mode<synchronous>, transform_indices = @transform_17, window_bounds = array<i64: 16, 1>}, {pipeline_mode = #tpu.pipeline_mode<synchronous>, transform_indices = @transform_18, window_bounds = array<i64: 16, 16>}, {pipeline_mode = #tpu.pipeline_mode<synchronous>, transform_indices = @transform_19, window_bounds = array<i64: 16, 1>}, {transform_indices = @transform_20, window_bounds = array<i64: 1, 16, 1>}]} {
    %c0 = arith.constant 0 : index
    %c0_0 = arith.constant 0 : index
    %c0_1 = arith.constant 0 : index
    %0 = vector.load %arg1[%c0, %c0_0, %c0_1] : memref<1x4x256xf32, #tpu.memory_space<vmem>>, vector<1x4x256xf32>
    %1 = vector.shape_cast %0 : vector<1x4x256xf32> to vector<4x256xf32>
    %c0_2 = arith.constant 0 : index
    %c0_3 = arith.constant 0 : index
    %2 = vector.load %arg2[%c0_2, %c0_3] : memref<256x64xf32, #tpu.memory_space<vmem>>, vector<256x64xf32>
    %cst = arith.constant dense<0.000000e+00> : vector<4x64xf32>
    %3 = tpu.matmul %1, %2, %cst {dimension_numbers = #tpu.dot_dimension_numbers<[1], [0], [0], [1], [0, 0, 1, 1], [], []>} : vector<4x256xf32>, vector<256x64xf32>, vector<4x64xf32> -> vector<4x64xf32>
    %c0_4 = arith.constant 0 : index
    %c0_5 = arith.constant 0 : index
    %4 = vector.load %arg3[%c0_4, %c0_5] : memref<4x9xf32, #tpu.memory_space<vmem>>, vector<4x9xf32>
    %c0_6 = arith.constant 0 : index
    %c0_7 = arith.constant 0 : index
    %5 = vector.load %arg4[%c0_6, %c0_7] : memref<4x1xf32, #tpu.memory_space<vmem>>, vector<4x1xf32>
    %cst_8 = arith.constant 0.000000e+00 : f32
    %6 = vector.broadcast %cst_8 : f32 to vector<4x256xf32>
    %7 = arith.maximumf %1, %6 : vector<4x256xf32>
    %8 = tpu.iota {dimensions = array<i32: 1>} : vector<1x256xi32>
    %c16_i32 = arith.constant 16 : i32
    %c0_i32 = arith.constant 0 : i32
    %9 = arith.cmpi eq, %c16_i32, %c0_i32 : i32
    %c1_i32 = arith.constant 1 : i32
    %10 = arith.select %9, %c1_i32, %c16_i32 : i32
    %11 = vector.broadcast %10 : i32 to vector<1x256xi32>
    %12 = arith.remsi %8, %11 : vector<1x256xi32>
    %c0_i32_9 = arith.constant 0 : i32
    %13 = vector.broadcast %c0_i32_9 : i32 to vector<1x256xi32>
    %14 = arith.cmpi ne, %12, %13 : vector<1x256xi32>
    %c0_i32_10 = arith.constant 0 : i32
    %15 = vector.broadcast %c0_i32_10 : i32 to vector<1x256xi32>
    %16 = arith.cmpi slt, %12, %15 : vector<1x256xi32>
    %c0_i32_11 = arith.constant 0 : i32
    %17 = arith.cmpi slt, %10, %c0_i32_11 : i32
    %18 = vector.broadcast %17 : i1 to vector<1x256xi1>
    %19 = vector.broadcast %18 : vector<1x256xi1> to vector<1x256xi1>
    %20 = arith.xori %16, %19 : vector<1x256xi1>
    %21 = arith.andi %20, %14 : vector<1x256xi1>
    %22 = vector.broadcast %10 : i32 to vector<1x256xi32>
    %23 = arith.addi %12, %22 : vector<1x256xi32>
    %24 = arith.select %21, %23, %12 : vector<1x256xi1>, vector<1x256xi32>
    %c0_i32_12 = arith.constant 0 : i32
    %25 = vector.broadcast %c0_i32_12 : i32 to vector<1x256xi32>
    %26 = arith.cmpi sgt, %24, %25 : vector<1x256xi32>
    %cst_13 = arith.constant 0.000000e+00 : f32
    %27 = vector.broadcast %cst_13 : f32 to vector<4x1xf32>
    %28 = vector.extract_strided_slice %7 {offsets = [0, 0], sizes = [4, 255], strides = [1, 1]} : vector<4x256xf32> to vector<4x255xf32>
    %29 = tpu.concatenate %27, %28 in 1 : vector<4x1xf32>, vector<4x255xf32> -> vector<4x256xf32>
    %cst_14 = arith.constant 0.000000e+00 : f32
    %30 = vector.shape_cast %26 : vector<1x256xi1> to vector<1x256xi1>
    %31 = vector.broadcast %30 : vector<1x256xi1> to vector<4x256xi1>
    %32 = vector.broadcast %cst_14 : f32 to vector<4x256xf32>
    %33 = arith.select %31, %29, %32 : vector<4x256xi1>, vector<4x256xf32>
    %c15_i32 = arith.constant 15 : i32
    %34 = vector.broadcast %c15_i32 : i32 to vector<1x256xi32>
    %35 = arith.cmpi slt, %24, %34 : vector<1x256xi32>
    %cst_15 = arith.constant 0.000000e+00 : f32
    %36 = vector.broadcast %cst_15 : f32 to vector<4x1xf32>
    %37 = vector.extract_strided_slice %7 {offsets = [0, 1], sizes = [4, 255], strides = [1, 1]} : vector<4x256xf32> to vector<4x255xf32>
    %38 = tpu.concatenate %37, %36 in 1 : vector<4x255xf32>, vector<4x1xf32> -> vector<4x256xf32>
    %cst_16 = arith.constant 0.000000e+00 : f32
    %39 = vector.shape_cast %35 : vector<1x256xi1> to vector<1x256xi1>
    %40 = vector.broadcast %39 : vector<1x256xi1> to vector<4x256xi1>
    %41 = vector.broadcast %cst_16 : f32 to vector<4x256xf32>
    %42 = arith.select %40, %38, %41 : vector<4x256xi1>, vector<4x256xf32>
    %43 = vector.extract_strided_slice %4 {offsets = [0, 4], sizes = [4, 1], strides = [1, 1]} : vector<4x9xf32> to vector<4x1xf32>
    %44 = vector.broadcast %43 : vector<4x1xf32> to vector<4x256xf32>
    %45 = arith.mulf %7, %44 : vector<4x256xf32>
    %46 = vector.broadcast %5 : vector<4x1xf32> to vector<4x256xf32>
    %47 = arith.addf %45, %46 : vector<4x256xf32>
    %cst_17 = arith.constant 0.000000e+00 : f32
    %48 = vector.broadcast %cst_17 : f32 to vector<4x16xf32>
    %49 = vector.extract_strided_slice %33 {offsets = [0, 0], sizes = [4, 240], strides = [1, 1]} : vector<4x256xf32> to vector<4x240xf32>
    %50 = tpu.concatenate %48, %49 in 1 : vector<4x16xf32>, vector<4x240xf32> -> vector<4x256xf32>
    %51 = vector.extract_strided_slice %4 {offsets = [0, 0], sizes = [4, 1], strides = [1, 1]} : vector<4x9xf32> to vector<4x1xf32>
    %52 = vector.broadcast %51 : vector<4x1xf32> to vector<4x256xf32>
    %53 = arith.mulf %50, %52 : vector<4x256xf32>
    %54 = arith.addf %47, %53 : vector<4x256xf32>
    %cst_18 = arith.constant 0.000000e+00 : f32
    %55 = vector.broadcast %cst_18 : f32 to vector<4x16xf32>
    %56 = vector.extract_strided_slice %7 {offsets = [0, 0], sizes = [4, 240], strides = [1, 1]} : vector<4x256xf32> to vector<4x240xf32>
    %57 = tpu.concatenate %55, %56 in 1 : vector<4x16xf32>, vector<4x240xf32> -> vector<4x256xf32>
    %58 = vector.extract_strided_slice %4 {offsets = [0, 1], sizes = [4, 1], strides = [1, 1]} : vector<4x9xf32> to vector<4x1xf32>
    %59 = vector.broadcast %58 : vector<4x1xf32> to vector<4x256xf32>
    %60 = arith.mulf %57, %59 : vector<4x256xf32>
    %61 = arith.addf %54, %60 : vector<4x256xf32>
    %cst_19 = arith.constant 0.000000e+00 : f32
    %62 = vector.broadcast %cst_19 : f32 to vector<4x16xf32>
    %63 = vector.extract_strided_slice %42 {offsets = [0, 0], sizes = [4, 240], strides = [1, 1]} : vector<4x256xf32> to vector<4x240xf32>
    %64 = tpu.concatenate %62, %63 in 1 : vector<4x16xf32>, vector<4x240xf32> -> vector<4x256xf32>
    %65 = vector.extract_strided_slice %4 {offsets = [0, 2], sizes = [4, 1], strides = [1, 1]} : vector<4x9xf32> to vector<4x1xf32>
    %66 = vector.broadcast %65 : vector<4x1xf32> to vector<4x256xf32>
    %67 = arith.mulf %64, %66 : vector<4x256xf32>
    %68 = arith.addf %61, %67 : vector<4x256xf32>
    %69 = vector.extract_strided_slice %4 {offsets = [0, 3], sizes = [4, 1], strides = [1, 1]} : vector<4x9xf32> to vector<4x1xf32>
    %70 = vector.broadcast %69 : vector<4x1xf32> to vector<4x256xf32>
    %71 = arith.mulf %33, %70 : vector<4x256xf32>
    %72 = arith.addf %68, %71 : vector<4x256xf32>
    %73 = vector.extract_strided_slice %4 {offsets = [0, 5], sizes = [4, 1], strides = [1, 1]} : vector<4x9xf32> to vector<4x1xf32>
    %74 = vector.broadcast %73 : vector<4x1xf32> to vector<4x256xf32>
    %75 = arith.mulf %42, %74 : vector<4x256xf32>
    %76 = arith.addf %72, %75 : vector<4x256xf32>
    %cst_20 = arith.constant 0.000000e+00 : f32
    %77 = vector.broadcast %cst_20 : f32 to vector<4x16xf32>
    %78 = vector.extract_strided_slice %33 {offsets = [0, 16], sizes = [4, 240], strides = [1, 1]} : vector<4x256xf32> to vector<4x240xf32>
    %79 = tpu.concatenate %78, %77 in 1 : vector<4x240xf32>, vector<4x16xf32> -> vector<4x256xf32>
    %80 = vector.extract_strided_slice %4 {offsets = [0, 6], sizes = [4, 1], strides = [1, 1]} : vector<4x9xf32> to vector<4x1xf32>
    %81 = vector.broadcast %80 : vector<4x1xf32> to vector<4x256xf32>
    %82 = arith.mulf %79, %81 : vector<4x256xf32>
    %83 = arith.addf %76, %82 : vector<4x256xf32>
    %cst_21 = arith.constant 0.000000e+00 : f32
    %84 = vector.broadcast %cst_21 : f32 to vector<4x16xf32>
    %85 = vector.extract_strided_slice %7 {offsets = [0, 16], sizes = [4, 240], strides = [1, 1]} : vector<4x256xf32> to vector<4x240xf32>
    %86 = tpu.concatenate %85, %84 in 1 : vector<4x240xf32>, vector<4x16xf32> -> vector<4x256xf32>
    %87 = vector.extract_strided_slice %4 {offsets = [0, 7], sizes = [4, 1], strides = [1, 1]} : vector<4x9xf32> to vector<4x1xf32>
    %88 = vector.broadcast %87 : vector<4x1xf32> to vector<4x256xf32>
    %89 = arith.mulf %86, %88 : vector<4x256xf32>
    %90 = arith.addf %83, %89 : vector<4x256xf32>
    %cst_22 = arith.constant 0.000000e+00 : f32
    %91 = vector.broadcast %cst_22 : f32 to vector<4x16xf32>
    %92 = vector.extract_strided_slice %42 {offsets = [0, 16], sizes = [4, 240], strides = [1, 1]} : vector<4x256xf32> to vector<4x240xf32>
    %93 = tpu.concatenate %92, %91 in 1 : vector<4x240xf32>, vector<4x16xf32> -> vector<4x256xf32>
    %94 = vector.extract_strided_slice %4 {offsets = [0, 8], sizes = [4, 1], strides = [1, 1]} : vector<4x9xf32> to vector<4x1xf32>
    %95 = vector.broadcast %94 : vector<4x1xf32> to vector<4x256xf32>
    %96 = arith.mulf %93, %95 : vector<4x256xf32>
    %97 = arith.addf %90, %96 : vector<4x256xf32>
    %c0_23 = arith.constant 0 : index
    %c0_24 = arith.constant 0 : index
    %98 = vector.load %arg5[%c0_23, %c0_24] : memref<8x4xf32, #tpu.memory_space<vmem>>, vector<8x4xf32>
    %c0_25 = arith.constant 0 : index
    %c0_26 = arith.constant 0 : index
    %99 = vector.load %arg6[%c0_25, %c0_26] : memref<8x1xf32, #tpu.memory_space<vmem>>, vector<8x1xf32>
    %cst_27 = arith.constant dense<0.000000e+00> : vector<8x256xf32>
    %100 = tpu.matmul %98, %97, %cst_27 {dimension_numbers = #tpu.dot_dimension_numbers<[1], [0], [0], [1], [0, 0, 1, 1], [], []>} : vector<8x4xf32>, vector<4x256xf32>, vector<8x256xf32> -> vector<8x256xf32>
    %101 = vector.broadcast %99 : vector<8x1xf32> to vector<8x256xf32>
    %102 = arith.addf %100, %101 : vector<8x256xf32>
    %c0_28 = arith.constant 0 : index
    %c0_29 = arith.constant 0 : index
    %103 = vector.load %arg7[%c0_28, %c0_29] : memref<8x9xf32, #tpu.memory_space<vmem>>, vector<8x9xf32>
    %c0_30 = arith.constant 0 : index
    %c0_31 = arith.constant 0 : index
    %104 = vector.load %arg8[%c0_30, %c0_31] : memref<8x1xf32, #tpu.memory_space<vmem>>, vector<8x1xf32>
    %cst_32 = arith.constant 0.000000e+00 : f32
    %105 = vector.broadcast %cst_32 : f32 to vector<8x256xf32>
    %106 = arith.maximumf %102, %105 : vector<8x256xf32>
    %107 = tpu.iota {dimensions = array<i32: 1>} : vector<1x256xi32>
    %c16_i32_33 = arith.constant 16 : i32
    %c0_i32_34 = arith.constant 0 : i32
    %108 = arith.cmpi eq, %c16_i32_33, %c0_i32_34 : i32
    %c1_i32_35 = arith.constant 1 : i32
    %109 = arith.select %108, %c1_i32_35, %c16_i32_33 : i32
    %110 = vector.broadcast %109 : i32 to vector<1x256xi32>
    %111 = arith.remsi %107, %110 : vector<1x256xi32>
    %c0_i32_36 = arith.constant 0 : i32
    %112 = vector.broadcast %c0_i32_36 : i32 to vector<1x256xi32>
    %113 = arith.cmpi ne, %111, %112 : vector<1x256xi32>
    %c0_i32_37 = arith.constant 0 : i32
    %114 = vector.broadcast %c0_i32_37 : i32 to vector<1x256xi32>
    %115 = arith.cmpi slt, %111, %114 : vector<1x256xi32>
    %c0_i32_38 = arith.constant 0 : i32
    %116 = arith.cmpi slt, %109, %c0_i32_38 : i32
    %117 = vector.broadcast %116 : i1 to vector<1x256xi1>
    %118 = vector.broadcast %117 : vector<1x256xi1> to vector<1x256xi1>
    %119 = arith.xori %115, %118 : vector<1x256xi1>
    %120 = arith.andi %119, %113 : vector<1x256xi1>
    %121 = vector.broadcast %109 : i32 to vector<1x256xi32>
    %122 = arith.addi %111, %121 : vector<1x256xi32>
    %123 = arith.select %120, %122, %111 : vector<1x256xi1>, vector<1x256xi32>
    %c0_i32_39 = arith.constant 0 : i32
    %124 = vector.broadcast %c0_i32_39 : i32 to vector<1x256xi32>
    %125 = arith.cmpi sgt, %123, %124 : vector<1x256xi32>
    %cst_40 = arith.constant 0.000000e+00 : f32
    %126 = vector.broadcast %cst_40 : f32 to vector<8x1xf32>
    %127 = vector.extract_strided_slice %106 {offsets = [0, 0], sizes = [8, 255], strides = [1, 1]} : vector<8x256xf32> to vector<8x255xf32>
    %128 = tpu.concatenate %126, %127 in 1 : vector<8x1xf32>, vector<8x255xf32> -> vector<8x256xf32>
    %cst_41 = arith.constant 0.000000e+00 : f32
    %129 = vector.shape_cast %125 : vector<1x256xi1> to vector<1x256xi1>
    %130 = vector.broadcast %129 : vector<1x256xi1> to vector<8x256xi1>
    %131 = vector.broadcast %cst_41 : f32 to vector<8x256xf32>
    %132 = arith.select %130, %128, %131 : vector<8x256xi1>, vector<8x256xf32>
    %c15_i32_42 = arith.constant 15 : i32
    %133 = vector.broadcast %c15_i32_42 : i32 to vector<1x256xi32>
    %134 = arith.cmpi slt, %123, %133 : vector<1x256xi32>
    %cst_43 = arith.constant 0.000000e+00 : f32
    %135 = vector.broadcast %cst_43 : f32 to vector<8x1xf32>
    %136 = vector.extract_strided_slice %106 {offsets = [0, 1], sizes = [8, 255], strides = [1, 1]} : vector<8x256xf32> to vector<8x255xf32>
    %137 = tpu.concatenate %136, %135 in 1 : vector<8x255xf32>, vector<8x1xf32> -> vector<8x256xf32>
    %cst_44 = arith.constant 0.000000e+00 : f32
    %138 = vector.shape_cast %134 : vector<1x256xi1> to vector<1x256xi1>
    %139 = vector.broadcast %138 : vector<1x256xi1> to vector<8x256xi1>
    %140 = vector.broadcast %cst_44 : f32 to vector<8x256xf32>
    %141 = arith.select %139, %137, %140 : vector<8x256xi1>, vector<8x256xf32>
    %142 = vector.extract_strided_slice %103 {offsets = [0, 4], sizes = [8, 1], strides = [1, 1]} : vector<8x9xf32> to vector<8x1xf32>
    %143 = vector.broadcast %142 : vector<8x1xf32> to vector<8x256xf32>
    %144 = arith.mulf %106, %143 : vector<8x256xf32>
    %145 = vector.broadcast %104 : vector<8x1xf32> to vector<8x256xf32>
    %146 = arith.addf %144, %145 : vector<8x256xf32>
    %cst_45 = arith.constant 0.000000e+00 : f32
    %147 = vector.broadcast %cst_45 : f32 to vector<8x16xf32>
    %148 = vector.extract_strided_slice %132 {offsets = [0, 0], sizes = [8, 240], strides = [1, 1]} : vector<8x256xf32> to vector<8x240xf32>
    %149 = tpu.concatenate %147, %148 in 1 : vector<8x16xf32>, vector<8x240xf32> -> vector<8x256xf32>
    %150 = vector.extract_strided_slice %103 {offsets = [0, 0], sizes = [8, 1], strides = [1, 1]} : vector<8x9xf32> to vector<8x1xf32>
    %151 = vector.broadcast %150 : vector<8x1xf32> to vector<8x256xf32>
    %152 = arith.mulf %149, %151 : vector<8x256xf32>
    %153 = arith.addf %146, %152 : vector<8x256xf32>
    %cst_46 = arith.constant 0.000000e+00 : f32
    %154 = vector.broadcast %cst_46 : f32 to vector<8x16xf32>
    %155 = vector.extract_strided_slice %106 {offsets = [0, 0], sizes = [8, 240], strides = [1, 1]} : vector<8x256xf32> to vector<8x240xf32>
    %156 = tpu.concatenate %154, %155 in 1 : vector<8x16xf32>, vector<8x240xf32> -> vector<8x256xf32>
    %157 = vector.extract_strided_slice %103 {offsets = [0, 1], sizes = [8, 1], strides = [1, 1]} : vector<8x9xf32> to vector<8x1xf32>
    %158 = vector.broadcast %157 : vector<8x1xf32> to vector<8x256xf32>
    %159 = arith.mulf %156, %158 : vector<8x256xf32>
    %160 = arith.addf %153, %159 : vector<8x256xf32>
    %cst_47 = arith.constant 0.000000e+00 : f32
    %161 = vector.broadcast %cst_47 : f32 to vector<8x16xf32>
    %162 = vector.extract_strided_slice %141 {offsets = [0, 0], sizes = [8, 240], strides = [1, 1]} : vector<8x256xf32> to vector<8x240xf32>
    %163 = tpu.concatenate %161, %162 in 1 : vector<8x16xf32>, vector<8x240xf32> -> vector<8x256xf32>
    %164 = vector.extract_strided_slice %103 {offsets = [0, 2], sizes = [8, 1], strides = [1, 1]} : vector<8x9xf32> to vector<8x1xf32>
    %165 = vector.broadcast %164 : vector<8x1xf32> to vector<8x256xf32>
    %166 = arith.mulf %163, %165 : vector<8x256xf32>
    %167 = arith.addf %160, %166 : vector<8x256xf32>
    %168 = vector.extract_strided_slice %103 {offsets = [0, 3], sizes = [8, 1], strides = [1, 1]} : vector<8x9xf32> to vector<8x1xf32>
    %169 = vector.broadcast %168 : vector<8x1xf32> to vector<8x256xf32>
    %170 = arith.mulf %132, %169 : vector<8x256xf32>
    %171 = arith.addf %167, %170 : vector<8x256xf32>
    %172 = vector.extract_strided_slice %103 {offsets = [0, 5], sizes = [8, 1], strides = [1, 1]} : vector<8x9xf32> to vector<8x1xf32>
    %173 = vector.broadcast %172 : vector<8x1xf32> to vector<8x256xf32>
    %174 = arith.mulf %141, %173 : vector<8x256xf32>
    %175 = arith.addf %171, %174 : vector<8x256xf32>
    %cst_48 = arith.constant 0.000000e+00 : f32
    %176 = vector.broadcast %cst_48 : f32 to vector<8x16xf32>
    %177 = vector.extract_strided_slice %132 {offsets = [0, 16], sizes = [8, 240], strides = [1, 1]} : vector<8x256xf32> to vector<8x240xf32>
    %178 = tpu.concatenate %177, %176 in 1 : vector<8x240xf32>, vector<8x16xf32> -> vector<8x256xf32>
    %179 = vector.extract_strided_slice %103 {offsets = [0, 6], sizes = [8, 1], strides = [1, 1]} : vector<8x9xf32> to vector<8x1xf32>
    %180 = vector.broadcast %179 : vector<8x1xf32> to vector<8x256xf32>
    %181 = arith.mulf %178, %180 : vector<8x256xf32>
    %182 = arith.addf %175, %181 : vector<8x256xf32>
    %cst_49 = arith.constant 0.000000e+00 : f32
    %183 = vector.broadcast %cst_49 : f32 to vector<8x16xf32>
    %184 = vector.extract_strided_slice %106 {offsets = [0, 16], sizes = [8, 240], strides = [1, 1]} : vector<8x256xf32> to vector<8x240xf32>
    %185 = tpu.concatenate %184, %183 in 1 : vector<8x240xf32>, vector<8x16xf32> -> vector<8x256xf32>
    %186 = vector.extract_strided_slice %103 {offsets = [0, 7], sizes = [8, 1], strides = [1, 1]} : vector<8x9xf32> to vector<8x1xf32>
    %187 = vector.broadcast %186 : vector<8x1xf32> to vector<8x256xf32>
    %188 = arith.mulf %185, %187 : vector<8x256xf32>
    %189 = arith.addf %182, %188 : vector<8x256xf32>
    %cst_50 = arith.constant 0.000000e+00 : f32
    %190 = vector.broadcast %cst_50 : f32 to vector<8x16xf32>
    %191 = vector.extract_strided_slice %141 {offsets = [0, 16], sizes = [8, 240], strides = [1, 1]} : vector<8x256xf32> to vector<8x240xf32>
    %192 = tpu.concatenate %191, %190 in 1 : vector<8x240xf32>, vector<8x16xf32> -> vector<8x256xf32>
    %193 = vector.extract_strided_slice %103 {offsets = [0, 8], sizes = [8, 1], strides = [1, 1]} : vector<8x9xf32> to vector<8x1xf32>
    %194 = vector.broadcast %193 : vector<8x1xf32> to vector<8x256xf32>
    %195 = arith.mulf %192, %194 : vector<8x256xf32>
    %196 = arith.addf %189, %195 : vector<8x256xf32>
    %c0_51 = arith.constant 0 : index
    %c0_52 = arith.constant 0 : index
    %197 = vector.load %arg9[%c0_51, %c0_52] : memref<8x8xf32, #tpu.memory_space<vmem>>, vector<8x8xf32>
    %c0_53 = arith.constant 0 : index
    %c0_54 = arith.constant 0 : index
    %198 = vector.load %arg10[%c0_53, %c0_54] : memref<8x1xf32, #tpu.memory_space<vmem>>, vector<8x1xf32>
    %cst_55 = arith.constant dense<0.000000e+00> : vector<8x256xf32>
    %199 = tpu.matmul %197, %196, %cst_55 {dimension_numbers = #tpu.dot_dimension_numbers<[1], [0], [0], [1], [0, 0, 1, 1], [], []>} : vector<8x8xf32>, vector<8x256xf32>, vector<8x256xf32> -> vector<8x256xf32>
    %200 = vector.broadcast %198 : vector<8x1xf32> to vector<8x256xf32>
    %201 = arith.addf %199, %200 : vector<8x256xf32>
    %202 = tpu.iota {dimensions = array<i32: 1>} : vector<1x256xi32>
    %c16_i32_56 = arith.constant 16 : i32
    %c0_i32_57 = arith.constant 0 : i32
    %203 = arith.cmpi eq, %c16_i32_56, %c0_i32_57 : i32
    %c1_i32_58 = arith.constant 1 : i32
    %204 = arith.select %203, %c1_i32_58, %c16_i32_56 : i32
    %205 = vector.broadcast %204 : i32 to vector<1x256xi32>
    %206 = arith.remsi %202, %205 : vector<1x256xi32>
    %c0_i32_59 = arith.constant 0 : i32
    %207 = vector.broadcast %c0_i32_59 : i32 to vector<1x256xi32>
    %208 = arith.cmpi ne, %206, %207 : vector<1x256xi32>
    %c0_i32_60 = arith.constant 0 : i32
    %209 = vector.broadcast %c0_i32_60 : i32 to vector<1x256xi32>
    %210 = arith.cmpi slt, %206, %209 : vector<1x256xi32>
    %c0_i32_61 = arith.constant 0 : i32
    %211 = arith.cmpi slt, %204, %c0_i32_61 : i32
    %212 = vector.broadcast %211 : i1 to vector<1x256xi1>
    %213 = vector.broadcast %212 : vector<1x256xi1> to vector<1x256xi1>
    %214 = arith.xori %210, %213 : vector<1x256xi1>
    %215 = arith.andi %214, %208 : vector<1x256xi1>
    %216 = vector.broadcast %204 : i32 to vector<1x256xi32>
    %217 = arith.addi %206, %216 : vector<1x256xi32>
    %218 = arith.select %215, %217, %206 : vector<1x256xi1>, vector<1x256xi32>
    %c0_i32_62 = arith.constant 0 : i32
    %219 = vector.broadcast %c0_i32_62 : i32 to vector<1x256xi32>
    %220 = arith.cmpi sgt, %218, %219 : vector<1x256xi32>
    %cst_63 = arith.constant 0xFF800000 : f32
    %221 = vector.broadcast %cst_63 : f32 to vector<8x1xf32>
    %222 = vector.extract_strided_slice %201 {offsets = [0, 0], sizes = [8, 255], strides = [1, 1]} : vector<8x256xf32> to vector<8x255xf32>
    %223 = tpu.concatenate %221, %222 in 1 : vector<8x1xf32>, vector<8x255xf32> -> vector<8x256xf32>
    %cst_64 = arith.constant 0xFF800000 : f32
    %224 = vector.shape_cast %220 : vector<1x256xi1> to vector<1x256xi1>
    %225 = vector.broadcast %224 : vector<1x256xi1> to vector<8x256xi1>
    %226 = vector.broadcast %cst_64 : f32 to vector<8x256xf32>
    %227 = arith.select %225, %223, %226 : vector<8x256xi1>, vector<8x256xf32>
    %c15_i32_65 = arith.constant 15 : i32
    %228 = vector.broadcast %c15_i32_65 : i32 to vector<1x256xi32>
    %229 = arith.cmpi slt, %218, %228 : vector<1x256xi32>
    %cst_66 = arith.constant 0xFF800000 : f32
    %230 = vector.broadcast %cst_66 : f32 to vector<8x1xf32>
    %231 = vector.extract_strided_slice %201 {offsets = [0, 1], sizes = [8, 255], strides = [1, 1]} : vector<8x256xf32> to vector<8x255xf32>
    %232 = tpu.concatenate %231, %230 in 1 : vector<8x255xf32>, vector<8x1xf32> -> vector<8x256xf32>
    %cst_67 = arith.constant 0xFF800000 : f32
    %233 = vector.shape_cast %229 : vector<1x256xi1> to vector<1x256xi1>
    %234 = vector.broadcast %233 : vector<1x256xi1> to vector<8x256xi1>
    %235 = vector.broadcast %cst_67 : f32 to vector<8x256xf32>
    %236 = arith.select %234, %232, %235 : vector<8x256xi1>, vector<8x256xf32>
    %237 = arith.maximumf %227, %236 : vector<8x256xf32>
    %238 = arith.maximumf %237, %201 : vector<8x256xf32>
    %cst_68 = arith.constant 0xFF800000 : f32
    %239 = vector.broadcast %cst_68 : f32 to vector<8x16xf32>
    %240 = vector.extract_strided_slice %238 {offsets = [0, 0], sizes = [8, 240], strides = [1, 1]} : vector<8x256xf32> to vector<8x240xf32>
    %241 = tpu.concatenate %239, %240 in 1 : vector<8x16xf32>, vector<8x240xf32> -> vector<8x256xf32>
    %cst_69 = arith.constant 0xFF800000 : f32
    %242 = vector.broadcast %cst_69 : f32 to vector<8x16xf32>
    %243 = vector.extract_strided_slice %238 {offsets = [0, 16], sizes = [8, 240], strides = [1, 1]} : vector<8x256xf32> to vector<8x240xf32>
    %244 = tpu.concatenate %243, %242 in 1 : vector<8x240xf32>, vector<8x16xf32> -> vector<8x256xf32>
    %245 = arith.maximumf %241, %244 : vector<8x256xf32>
    %246 = arith.maximumf %245, %238 : vector<8x256xf32>
    %cst_70 = arith.constant dense<0.000000e+00> : vector<8x64xf32>
    %247 = tpu.matmul %246, %2, %cst_70 {dimension_numbers = #tpu.dot_dimension_numbers<[1], [0], [0], [1], [0, 0, 1, 1], [], []>} : vector<8x256xf32>, vector<256x64xf32>, vector<8x64xf32> -> vector<8x64xf32>
    %c0_71 = arith.constant 0 : index
    %c0_72 = arith.constant 0 : index
    %248 = vector.load %arg11[%c0_71, %c0_72] : memref<8x4xf32, #tpu.memory_space<vmem>>, vector<8x4xf32>
    %c0_73 = arith.constant 0 : index
    %c0_74 = arith.constant 0 : index
    %249 = vector.load %arg12[%c0_73, %c0_74] : memref<8x1xf32, #tpu.memory_space<vmem>>, vector<8x1xf32>
    %cst_75 = arith.constant dense<0.000000e+00> : vector<8x64xf32>
    %250 = tpu.matmul %248, %3, %cst_75 {dimension_numbers = #tpu.dot_dimension_numbers<[1], [0], [0], [1], [0, 0, 1, 1], [], []>} : vector<8x4xf32>, vector<4x64xf32>, vector<8x64xf32> -> vector<8x64xf32>
    %251 = vector.broadcast %249 : vector<8x1xf32> to vector<8x64xf32>
    %252 = arith.addf %250, %251 : vector<8x64xf32>
    %253 = arith.addf %247, %252 : vector<8x64xf32>
    %c0_76 = arith.constant 0 : index
    %c0_77 = arith.constant 0 : index
    %254 = vector.load %arg13[%c0_76, %c0_77] : memref<8x9xf32, #tpu.memory_space<vmem>>, vector<8x9xf32>
    %c0_78 = arith.constant 0 : index
    %c0_79 = arith.constant 0 : index
    %255 = vector.load %arg14[%c0_78, %c0_79] : memref<8x1xf32, #tpu.memory_space<vmem>>, vector<8x1xf32>
    %256 = tpu.iota {dimensions = array<i32: 1>} : vector<1x64xi32>
    %c8_i32 = arith.constant 8 : i32
    %c0_i32_80 = arith.constant 0 : i32
    %257 = arith.cmpi eq, %c8_i32, %c0_i32_80 : i32
    %c1_i32_81 = arith.constant 1 : i32
    %258 = arith.select %257, %c1_i32_81, %c8_i32 : i32
    %259 = vector.broadcast %258 : i32 to vector<1x64xi32>
    %260 = arith.remsi %256, %259 : vector<1x64xi32>
    %c0_i32_82 = arith.constant 0 : i32
    %261 = vector.broadcast %c0_i32_82 : i32 to vector<1x64xi32>
    %262 = arith.cmpi ne, %260, %261 : vector<1x64xi32>
    %c0_i32_83 = arith.constant 0 : i32
    %263 = vector.broadcast %c0_i32_83 : i32 to vector<1x64xi32>
    %264 = arith.cmpi slt, %260, %263 : vector<1x64xi32>
    %c0_i32_84 = arith.constant 0 : i32
    %265 = arith.cmpi slt, %258, %c0_i32_84 : i32
    %266 = vector.broadcast %265 : i1 to vector<1x64xi1>
    %267 = vector.broadcast %266 : vector<1x64xi1> to vector<1x64xi1>
    %268 = arith.xori %264, %267 : vector<1x64xi1>
    %269 = arith.andi %268, %262 : vector<1x64xi1>
    %270 = vector.broadcast %258 : i32 to vector<1x64xi32>
    %271 = arith.addi %260, %270 : vector<1x64xi32>
    %272 = arith.select %269, %271, %260 : vector<1x64xi1>, vector<1x64xi32>
    %c0_i32_85 = arith.constant 0 : i32
    %273 = vector.broadcast %c0_i32_85 : i32 to vector<1x64xi32>
    %274 = arith.cmpi sgt, %272, %273 : vector<1x64xi32>
    %cst_86 = arith.constant 0.000000e+00 : f32
    %275 = vector.broadcast %cst_86 : f32 to vector<8x1xf32>
    %276 = vector.extract_strided_slice %253 {offsets = [0, 0], sizes = [8, 63], strides = [1, 1]} : vector<8x64xf32> to vector<8x63xf32>
    %277 = tpu.concatenate %275, %276 in 1 : vector<8x1xf32>, vector<8x63xf32> -> vector<8x64xf32>
    %cst_87 = arith.constant 0.000000e+00 : f32
    %278 = vector.shape_cast %274 : vector<1x64xi1> to vector<1x64xi1>
    %279 = vector.broadcast %278 : vector<1x64xi1> to vector<8x64xi1>
    %280 = vector.broadcast %cst_87 : f32 to vector<8x64xf32>
    %281 = arith.select %279, %277, %280 : vector<8x64xi1>, vector<8x64xf32>
    %c7_i32 = arith.constant 7 : i32
    %282 = vector.broadcast %c7_i32 : i32 to vector<1x64xi32>
    %283 = arith.cmpi slt, %272, %282 : vector<1x64xi32>
    %cst_88 = arith.constant 0.000000e+00 : f32
    %284 = vector.broadcast %cst_88 : f32 to vector<8x1xf32>
    %285 = vector.extract_strided_slice %253 {offsets = [0, 1], sizes = [8, 63], strides = [1, 1]} : vector<8x64xf32> to vector<8x63xf32>
    %286 = tpu.concatenate %285, %284 in 1 : vector<8x63xf32>, vector<8x1xf32> -> vector<8x64xf32>
    %cst_89 = arith.constant 0.000000e+00 : f32
    %287 = vector.shape_cast %283 : vector<1x64xi1> to vector<1x64xi1>
    %288 = vector.broadcast %287 : vector<1x64xi1> to vector<8x64xi1>
    %289 = vector.broadcast %cst_89 : f32 to vector<8x64xf32>
    %290 = arith.select %288, %286, %289 : vector<8x64xi1>, vector<8x64xf32>
    %291 = vector.extract_strided_slice %254 {offsets = [0, 4], sizes = [8, 1], strides = [1, 1]} : vector<8x9xf32> to vector<8x1xf32>
    %292 = vector.broadcast %291 : vector<8x1xf32> to vector<8x64xf32>
    %293 = arith.mulf %253, %292 : vector<8x64xf32>
    %294 = vector.broadcast %255 : vector<8x1xf32> to vector<8x64xf32>
    %295 = arith.addf %293, %294 : vector<8x64xf32>
    %cst_90 = arith.constant 0.000000e+00 : f32
    %296 = vector.broadcast %cst_90 : f32 to vector<8x8xf32>
    %297 = vector.extract_strided_slice %281 {offsets = [0, 0], sizes = [8, 56], strides = [1, 1]} : vector<8x64xf32> to vector<8x56xf32>
    %298 = tpu.concatenate %296, %297 in 1 : vector<8x8xf32>, vector<8x56xf32> -> vector<8x64xf32>
    %299 = vector.extract_strided_slice %254 {offsets = [0, 0], sizes = [8, 1], strides = [1, 1]} : vector<8x9xf32> to vector<8x1xf32>
    %300 = vector.broadcast %299 : vector<8x1xf32> to vector<8x64xf32>
    %301 = arith.mulf %298, %300 : vector<8x64xf32>
    %302 = arith.addf %295, %301 : vector<8x64xf32>
    %cst_91 = arith.constant 0.000000e+00 : f32
    %303 = vector.broadcast %cst_91 : f32 to vector<8x8xf32>
    %304 = vector.extract_strided_slice %253 {offsets = [0, 0], sizes = [8, 56], strides = [1, 1]} : vector<8x64xf32> to vector<8x56xf32>
    %305 = tpu.concatenate %303, %304 in 1 : vector<8x8xf32>, vector<8x56xf32> -> vector<8x64xf32>
    %306 = vector.extract_strided_slice %254 {offsets = [0, 1], sizes = [8, 1], strides = [1, 1]} : vector<8x9xf32> to vector<8x1xf32>
    %307 = vector.broadcast %306 : vector<8x1xf32> to vector<8x64xf32>
    %308 = arith.mulf %305, %307 : vector<8x64xf32>
    %309 = arith.addf %302, %308 : vector<8x64xf32>
    %cst_92 = arith.constant 0.000000e+00 : f32
    %310 = vector.broadcast %cst_92 : f32 to vector<8x8xf32>
    %311 = vector.extract_strided_slice %290 {offsets = [0, 0], sizes = [8, 56], strides = [1, 1]} : vector<8x64xf32> to vector<8x56xf32>
    %312 = tpu.concatenate %310, %311 in 1 : vector<8x8xf32>, vector<8x56xf32> -> vector<8x64xf32>
    %313 = vector.extract_strided_slice %254 {offsets = [0, 2], sizes = [8, 1], strides = [1, 1]} : vector<8x9xf32> to vector<8x1xf32>
    %314 = vector.broadcast %313 : vector<8x1xf32> to vector<8x64xf32>
    %315 = arith.mulf %312, %314 : vector<8x64xf32>
    %316 = arith.addf %309, %315 : vector<8x64xf32>
    %317 = vector.extract_strided_slice %254 {offsets = [0, 3], sizes = [8, 1], strides = [1, 1]} : vector<8x9xf32> to vector<8x1xf32>
    %318 = vector.broadcast %317 : vector<8x1xf32> to vector<8x64xf32>
    %319 = arith.mulf %281, %318 : vector<8x64xf32>
    %320 = arith.addf %316, %319 : vector<8x64xf32>
    %321 = vector.extract_strided_slice %254 {offsets = [0, 5], sizes = [8, 1], strides = [1, 1]} : vector<8x9xf32> to vector<8x1xf32>
    %322 = vector.broadcast %321 : vector<8x1xf32> to vector<8x64xf32>
    %323 = arith.mulf %290, %322 : vector<8x64xf32>
    %324 = arith.addf %320, %323 : vector<8x64xf32>
    %cst_93 = arith.constant 0.000000e+00 : f32
    %325 = vector.broadcast %cst_93 : f32 to vector<8x8xf32>
    %326 = vector.extract_strided_slice %281 {offsets = [0, 8], sizes = [8, 56], strides = [1, 1]} : vector<8x64xf32> to vector<8x56xf32>
    %327 = tpu.concatenate %326, %325 in 1 : vector<8x56xf32>, vector<8x8xf32> -> vector<8x64xf32>
    %328 = vector.extract_strided_slice %254 {offsets = [0, 6], sizes = [8, 1], strides = [1, 1]} : vector<8x9xf32> to vector<8x1xf32>
    %329 = vector.broadcast %328 : vector<8x1xf32> to vector<8x64xf32>
    %330 = arith.mulf %327, %329 : vector<8x64xf32>
    %331 = arith.addf %324, %330 : vector<8x64xf32>
    %cst_94 = arith.constant 0.000000e+00 : f32
    %332 = vector.broadcast %cst_94 : f32 to vector<8x8xf32>
    %333 = vector.extract_strided_slice %253 {offsets = [0, 8], sizes = [8, 56], strides = [1, 1]} : vector<8x64xf32> to vector<8x56xf32>
    %334 = tpu.concatenate %333, %332 in 1 : vector<8x56xf32>, vector<8x8xf32> -> vector<8x64xf32>
    %335 = vector.extract_strided_slice %254 {offsets = [0, 7], sizes = [8, 1], strides = [1, 1]} : vector<8x9xf32> to vector<8x1xf32>
    %336 = vector.broadcast %335 : vector<8x1xf32> to vector<8x64xf32>
    %337 = arith.mulf %334, %336 : vector<8x64xf32>
    %338 = arith.addf %331, %337 : vector<8x64xf32>
    %cst_95 = arith.constant 0.000000e+00 : f32
    %339 = vector.broadcast %cst_95 : f32 to vector<8x8xf32>
    %340 = vector.extract_strided_slice %290 {offsets = [0, 8], sizes = [8, 56], strides = [1, 1]} : vector<8x64xf32> to vector<8x56xf32>
    %341 = tpu.concatenate %340, %339 in 1 : vector<8x56xf32>, vector<8x8xf32> -> vector<8x64xf32>
    %342 = vector.extract_strided_slice %254 {offsets = [0, 8], sizes = [8, 1], strides = [1, 1]} : vector<8x9xf32> to vector<8x1xf32>
    %343 = vector.broadcast %342 : vector<8x1xf32> to vector<8x64xf32>
    %344 = arith.mulf %341, %343 : vector<8x64xf32>
    %345 = arith.addf %338, %344 : vector<8x64xf32>
    %c0_96 = arith.constant 0 : index
    %c0_97 = arith.constant 0 : index
    %346 = vector.load %arg15[%c0_96, %c0_97] : memref<16x8xf32, #tpu.memory_space<vmem>>, vector<16x8xf32>
    %c0_98 = arith.constant 0 : index
    %c0_99 = arith.constant 0 : index
    %347 = vector.load %arg16[%c0_98, %c0_99] : memref<16x1xf32, #tpu.memory_space<vmem>>, vector<16x1xf32>
    %cst_100 = arith.constant dense<0.000000e+00> : vector<16x64xf32>
    %348 = tpu.matmul %346, %345, %cst_100 {dimension_numbers = #tpu.dot_dimension_numbers<[1], [0], [0], [1], [0, 0, 1, 1], [], []>} : vector<16x8xf32>, vector<8x64xf32>, vector<16x64xf32> -> vector<16x64xf32>
    %349 = vector.broadcast %347 : vector<16x1xf32> to vector<16x64xf32>
    %350 = arith.addf %348, %349 : vector<16x64xf32>
    %cst_101 = arith.constant 0.000000e+00 : f32
    %351 = vector.broadcast %cst_101 : f32 to vector<16x64xf32>
    %352 = arith.maximumf %350, %351 : vector<16x64xf32>
    %c0_102 = arith.constant 0 : index
    %c0_103 = arith.constant 0 : index
    %353 = vector.load %arg17[%c0_102, %c0_103] : memref<16x9xf32, #tpu.memory_space<vmem>>, vector<16x9xf32>
    %c0_104 = arith.constant 0 : index
    %c0_105 = arith.constant 0 : index
    %354 = vector.load %arg18[%c0_104, %c0_105] : memref<16x1xf32, #tpu.memory_space<vmem>>, vector<16x1xf32>
    %355 = tpu.iota {dimensions = array<i32: 1>} : vector<1x64xi32>
    %c8_i32_106 = arith.constant 8 : i32
    %c0_i32_107 = arith.constant 0 : i32
    %356 = arith.cmpi eq, %c8_i32_106, %c0_i32_107 : i32
    %c1_i32_108 = arith.constant 1 : i32
    %357 = arith.select %356, %c1_i32_108, %c8_i32_106 : i32
    %358 = vector.broadcast %357 : i32 to vector<1x64xi32>
    %359 = arith.remsi %355, %358 : vector<1x64xi32>
    %c0_i32_109 = arith.constant 0 : i32
    %360 = vector.broadcast %c0_i32_109 : i32 to vector<1x64xi32>
    %361 = arith.cmpi ne, %359, %360 : vector<1x64xi32>
    %c0_i32_110 = arith.constant 0 : i32
    %362 = vector.broadcast %c0_i32_110 : i32 to vector<1x64xi32>
    %363 = arith.cmpi slt, %359, %362 : vector<1x64xi32>
    %c0_i32_111 = arith.constant 0 : i32
    %364 = arith.cmpi slt, %357, %c0_i32_111 : i32
    %365 = vector.broadcast %364 : i1 to vector<1x64xi1>
    %366 = vector.broadcast %365 : vector<1x64xi1> to vector<1x64xi1>
    %367 = arith.xori %363, %366 : vector<1x64xi1>
    %368 = arith.andi %367, %361 : vector<1x64xi1>
    %369 = vector.broadcast %357 : i32 to vector<1x64xi32>
    %370 = arith.addi %359, %369 : vector<1x64xi32>
    %371 = arith.select %368, %370, %359 : vector<1x64xi1>, vector<1x64xi32>
    %c0_i32_112 = arith.constant 0 : i32
    %372 = vector.broadcast %c0_i32_112 : i32 to vector<1x64xi32>
    %373 = arith.cmpi sgt, %371, %372 : vector<1x64xi32>
    %cst_113 = arith.constant 0.000000e+00 : f32
    %374 = vector.broadcast %cst_113 : f32 to vector<16x1xf32>
    %375 = vector.extract_strided_slice %352 {offsets = [0, 0], sizes = [16, 63], strides = [1, 1]} : vector<16x64xf32> to vector<16x63xf32>
    %376 = tpu.concatenate %374, %375 in 1 : vector<16x1xf32>, vector<16x63xf32> -> vector<16x64xf32>
    %cst_114 = arith.constant 0.000000e+00 : f32
    %377 = vector.shape_cast %373 : vector<1x64xi1> to vector<1x64xi1>
    %378 = vector.broadcast %377 : vector<1x64xi1> to vector<16x64xi1>
    %379 = vector.broadcast %cst_114 : f32 to vector<16x64xf32>
    %380 = arith.select %378, %376, %379 : vector<16x64xi1>, vector<16x64xf32>
    %c7_i32_115 = arith.constant 7 : i32
    %381 = vector.broadcast %c7_i32_115 : i32 to vector<1x64xi32>
    %382 = arith.cmpi slt, %371, %381 : vector<1x64xi32>
    %cst_116 = arith.constant 0.000000e+00 : f32
    %383 = vector.broadcast %cst_116 : f32 to vector<16x1xf32>
    %384 = vector.extract_strided_slice %352 {offsets = [0, 1], sizes = [16, 63], strides = [1, 1]} : vector<16x64xf32> to vector<16x63xf32>
    %385 = tpu.concatenate %384, %383 in 1 : vector<16x63xf32>, vector<16x1xf32> -> vector<16x64xf32>
    %cst_117 = arith.constant 0.000000e+00 : f32
    %386 = vector.shape_cast %382 : vector<1x64xi1> to vector<1x64xi1>
    %387 = vector.broadcast %386 : vector<1x64xi1> to vector<16x64xi1>
    %388 = vector.broadcast %cst_117 : f32 to vector<16x64xf32>
    %389 = arith.select %387, %385, %388 : vector<16x64xi1>, vector<16x64xf32>
    %390 = vector.extract_strided_slice %353 {offsets = [0, 4], sizes = [16, 1], strides = [1, 1]} : vector<16x9xf32> to vector<16x1xf32>
    %391 = vector.broadcast %390 : vector<16x1xf32> to vector<16x64xf32>
    %392 = arith.mulf %352, %391 : vector<16x64xf32>
    %393 = vector.broadcast %354 : vector<16x1xf32> to vector<16x64xf32>
    %394 = arith.addf %392, %393 : vector<16x64xf32>
    %cst_118 = arith.constant 0.000000e+00 : f32
    %395 = vector.broadcast %cst_118 : f32 to vector<16x8xf32>
    %396 = vector.extract_strided_slice %380 {offsets = [0, 0], sizes = [16, 56], strides = [1, 1]} : vector<16x64xf32> to vector<16x56xf32>
    %397 = tpu.concatenate %395, %396 in 1 : vector<16x8xf32>, vector<16x56xf32> -> vector<16x64xf32>
    %398 = vector.extract_strided_slice %353 {offsets = [0, 0], sizes = [16, 1], strides = [1, 1]} : vector<16x9xf32> to vector<16x1xf32>
    %399 = vector.broadcast %398 : vector<16x1xf32> to vector<16x64xf32>
    %400 = arith.mulf %397, %399 : vector<16x64xf32>
    %401 = arith.addf %394, %400 : vector<16x64xf32>
    %cst_119 = arith.constant 0.000000e+00 : f32
    %402 = vector.broadcast %cst_119 : f32 to vector<16x8xf32>
    %403 = vector.extract_strided_slice %352 {offsets = [0, 0], sizes = [16, 56], strides = [1, 1]} : vector<16x64xf32> to vector<16x56xf32>
    %404 = tpu.concatenate %402, %403 in 1 : vector<16x8xf32>, vector<16x56xf32> -> vector<16x64xf32>
    %405 = vector.extract_strided_slice %353 {offsets = [0, 1], sizes = [16, 1], strides = [1, 1]} : vector<16x9xf32> to vector<16x1xf32>
    %406 = vector.broadcast %405 : vector<16x1xf32> to vector<16x64xf32>
    %407 = arith.mulf %404, %406 : vector<16x64xf32>
    %408 = arith.addf %401, %407 : vector<16x64xf32>
    %cst_120 = arith.constant 0.000000e+00 : f32
    %409 = vector.broadcast %cst_120 : f32 to vector<16x8xf32>
    %410 = vector.extract_strided_slice %389 {offsets = [0, 0], sizes = [16, 56], strides = [1, 1]} : vector<16x64xf32> to vector<16x56xf32>
    %411 = tpu.concatenate %409, %410 in 1 : vector<16x8xf32>, vector<16x56xf32> -> vector<16x64xf32>
    %412 = vector.extract_strided_slice %353 {offsets = [0, 2], sizes = [16, 1], strides = [1, 1]} : vector<16x9xf32> to vector<16x1xf32>
    %413 = vector.broadcast %412 : vector<16x1xf32> to vector<16x64xf32>
    %414 = arith.mulf %411, %413 : vector<16x64xf32>
    %415 = arith.addf %408, %414 : vector<16x64xf32>
    %416 = vector.extract_strided_slice %353 {offsets = [0, 3], sizes = [16, 1], strides = [1, 1]} : vector<16x9xf32> to vector<16x1xf32>
    %417 = vector.broadcast %416 : vector<16x1xf32> to vector<16x64xf32>
    %418 = arith.mulf %380, %417 : vector<16x64xf32>
    %419 = arith.addf %415, %418 : vector<16x64xf32>
    %420 = vector.extract_strided_slice %353 {offsets = [0, 5], sizes = [16, 1], strides = [1, 1]} : vector<16x9xf32> to vector<16x1xf32>
    %421 = vector.broadcast %420 : vector<16x1xf32> to vector<16x64xf32>
    %422 = arith.mulf %389, %421 : vector<16x64xf32>
    %423 = arith.addf %419, %422 : vector<16x64xf32>
    %cst_121 = arith.constant 0.000000e+00 : f32
    %424 = vector.broadcast %cst_121 : f32 to vector<16x8xf32>
    %425 = vector.extract_strided_slice %380 {offsets = [0, 8], sizes = [16, 56], strides = [1, 1]} : vector<16x64xf32> to vector<16x56xf32>
    %426 = tpu.concatenate %425, %424 in 1 : vector<16x56xf32>, vector<16x8xf32> -> vector<16x64xf32>
    %427 = vector.extract_strided_slice %353 {offsets = [0, 6], sizes = [16, 1], strides = [1, 1]} : vector<16x9xf32> to vector<16x1xf32>
    %428 = vector.broadcast %427 : vector<16x1xf32> to vector<16x64xf32>
    %429 = arith.mulf %426, %428 : vector<16x64xf32>
    %430 = arith.addf %423, %429 : vector<16x64xf32>
    %cst_122 = arith.constant 0.000000e+00 : f32
    %431 = vector.broadcast %cst_122 : f32 to vector<16x8xf32>
    %432 = vector.extract_strided_slice %352 {offsets = [0, 8], sizes = [16, 56], strides = [1, 1]} : vector<16x64xf32> to vector<16x56xf32>
    %433 = tpu.concatenate %432, %431 in 1 : vector<16x56xf32>, vector<16x8xf32> -> vector<16x64xf32>
    %434 = vector.extract_strided_slice %353 {offsets = [0, 7], sizes = [16, 1], strides = [1, 1]} : vector<16x9xf32> to vector<16x1xf32>
    %435 = vector.broadcast %434 : vector<16x1xf32> to vector<16x64xf32>
    %436 = arith.mulf %433, %435 : vector<16x64xf32>
    %437 = arith.addf %430, %436 : vector<16x64xf32>
    %cst_123 = arith.constant 0.000000e+00 : f32
    %438 = vector.broadcast %cst_123 : f32 to vector<16x8xf32>
    %439 = vector.extract_strided_slice %389 {offsets = [0, 8], sizes = [16, 56], strides = [1, 1]} : vector<16x64xf32> to vector<16x56xf32>
    %440 = tpu.concatenate %439, %438 in 1 : vector<16x56xf32>, vector<16x8xf32> -> vector<16x64xf32>
    %441 = vector.extract_strided_slice %353 {offsets = [0, 8], sizes = [16, 1], strides = [1, 1]} : vector<16x9xf32> to vector<16x1xf32>
    %442 = vector.broadcast %441 : vector<16x1xf32> to vector<16x64xf32>
    %443 = arith.mulf %440, %442 : vector<16x64xf32>
    %444 = arith.addf %437, %443 : vector<16x64xf32>
    %c0_124 = arith.constant 0 : index
    %c0_125 = arith.constant 0 : index
    %445 = vector.load %arg19[%c0_124, %c0_125] : memref<16x16xf32, #tpu.memory_space<vmem>>, vector<16x16xf32>
    %c0_126 = arith.constant 0 : index
    %c0_127 = arith.constant 0 : index
    %446 = vector.load %arg20[%c0_126, %c0_127] : memref<16x1xf32, #tpu.memory_space<vmem>>, vector<16x1xf32>
    %cst_128 = arith.constant dense<0.000000e+00> : vector<16x64xf32>
    %447 = tpu.matmul %445, %444, %cst_128 {dimension_numbers = #tpu.dot_dimension_numbers<[1], [0], [0], [1], [0, 0, 1, 1], [], []>} : vector<16x16xf32>, vector<16x64xf32>, vector<16x64xf32> -> vector<16x64xf32>
    %448 = vector.broadcast %446 : vector<16x1xf32> to vector<16x64xf32>
    %449 = arith.addf %447, %448 : vector<16x64xf32>
    %cst_129 = arith.constant 0.000000e+00 : f32
    %450 = vector.broadcast %cst_129 : f32 to vector<16x64xf32>
    %451 = arith.maximumf %449, %450 : vector<16x64xf32>
    %cst_130 = arith.constant dense<0.000000e+00> : vector<16xf32>
    %452 = vector.multi_reduction <add>, %451, %cst_130 [1] : vector<16x64xf32> to vector<16xf32>
    %453 = vector.shape_cast %452 : vector<16xf32> to vector<16x1xf32>
    %cst_131 = arith.constant 1.562500e-02 : f32
    %454 = vector.broadcast %cst_131 : f32 to vector<16x1xf32>
    %455 = arith.mulf %453, %454 : vector<16x1xf32>
    %456 = vector.shape_cast %455 : vector<16x1xf32> to vector<1x16x1xf32>
    %c0_132 = arith.constant 0 : index
    %c0_133 = arith.constant 0 : index
    %c0_134 = arith.constant 0 : index
    %457 = vector.load %arg21[%c0_132, %c0_133, %c0_134] : memref<1x16x1xf32, #tpu.memory_space<vmem>>, vector<1x16x1xf32>
    tpu.vector_store %arg21[%c0_132, %c0_133, %c0_134], %456 {strides = array<i32>} : memref<1x16x1xf32, #tpu.memory_space<vmem>>, vector<1x16x1xf32>,
    return
  }
  func.func @transform_0(%arg0: i32) -> (i32, i32, i32) {
    %c0_i32 = arith.constant 0 : i32
    %c0_i32_0 = arith.constant 0 : i32
    %c0_i32_1 = arith.constant 0 : i32
    return %arg0, %c0_i32, %c0_i32_0 : i32, i32, i32
  }
  func.func @transform_1(%arg0: i32) -> (i32, i32) {
    %c0_i32 = arith.constant 0 : i32
    %c0_i32_0 = arith.constant 0 : i32
    %c0_i32_1 = arith.constant 0 : i32
    return %c0_i32, %c0_i32_0 : i32, i32
  }
  func.func @transform_2(%arg0: i32) -> (i32, i32) {
    %c0_i32 = arith.constant 0 : i32
    %c0_i32_0 = arith.constant 0 : i32
    %c0_i32_1 = arith.constant 0 : i32
    return %c0_i32, %c0_i32_0 : i32, i32
  }
  func.func @transform_3(%arg0: i32) -> (i32, i32) {
    %c0_i32 = arith.constant 0 : i32
    %c0_i32_0 = arith.constant 0 : i32
    %c0_i32_1 = arith.constant 0 : i32
    return %c0_i32, %c0_i32_0 : i32, i32
  }
  func.func @transform_4(%arg0: i32) -> (i32, i32) {
    %c0_i32 = arith.constant 0 : i32
    %c0_i32_0 = arith.constant 0 : i32
    %c0_i32_1 = arith.constant 0 : i32
    return %c0_i32, %c0_i32_0 : i32, i32
  }
  func.func @transform_5(%arg0: i32) -> (i32, i32) {
    %c0_i32 = arith.constant 0 : i32
    %c0_i32_0 = arith.constant 0 : i32
    %c0_i32_1 = arith.constant 0 : i32
    return %c0_i32, %c0_i32_0 : i32, i32
  }
  func.func @transform_6(%arg0: i32) -> (i32, i32) {
    %c0_i32 = arith.constant 0 : i32
    %c0_i32_0 = arith.constant 0 : i32
    %c0_i32_1 = arith.constant 0 : i32
    return %c0_i32, %c0_i32_0 : i32, i32
  }
  func.func @transform_7(%arg0: i32) -> (i32, i32) {
    %c0_i32 = arith.constant 0 : i32
    %c0_i32_0 = arith.constant 0 : i32
    %c0_i32_1 = arith.constant 0 : i32
    return %c0_i32, %c0_i32_0 : i32, i32
  }
  func.func @transform_8(%arg0: i32) -> (i32, i32) {
    %c0_i32 = arith.constant 0 : i32
    %c0_i32_0 = arith.constant 0 : i32
    %c0_i32_1 = arith.constant 0 : i32
    return %c0_i32, %c0_i32_0 : i32, i32
  }
  func.func @transform_9(%arg0: i32) -> (i32, i32) {
    %c0_i32 = arith.constant 0 : i32
    %c0_i32_0 = arith.constant 0 : i32
    %c0_i32_1 = arith.constant 0 : i32
    return %c0_i32, %c0_i32_0 : i32, i32
  }
  func.func @transform_10(%arg0: i32) -> (i32, i32) {
    %c0_i32 = arith.constant 0 : i32
    %c0_i32_0 = arith.constant 0 : i32
    %c0_i32_1 = arith.constant 0 : i32
    return %c0_i32, %c0_i32_0 : i32, i32
  }
  func.func @transform_11(%arg0: i32) -> (i32, i32) {
    %c0_i32 = arith.constant 0 : i32
    %c0_i32_0 = arith.constant 0 : i32
    %c0_i32_1 = arith.constant 0 : i32
    return %c0_i32, %c0_i32_0 : i32, i32
  }
  func.func @transform_12(%arg0: i32) -> (i32, i32) {
    %c0_i32 = arith.constant 0 : i32
    %c0_i32_0 = arith.constant 0 : i32
    %c0_i32_1 = arith.constant 0 : i32
    return %c0_i32, %c0_i32_0 : i32, i32
  }
  func.func @transform_13(%arg0: i32) -> (i32, i32) {
    %c0_i32 = arith.constant 0 : i32
    %c0_i32_0 = arith.constant 0 : i32
    %c0_i32_1 = arith.constant 0 : i32
    return %c0_i32, %c0_i32_0 : i32, i32
  }
  func.func @transform_14(%arg0: i32) -> (i32, i32) {
    %c0_i32 = arith.constant 0 : i32
    %c0_i32_0 = arith.constant 0 : i32
    %c0_i32_1 = arith.constant 0 : i32
    return %c0_i32, %c0_i32_0 : i32, i32
  }
  func.func @transform_15(%arg0: i32) -> (i32, i32) {
    %c0_i32 = arith.constant 0 : i32
    %c0_i32_0 = arith.constant 0 : i32
    %c0_i32_1 = arith.constant 0 : i32
    return %c0_i32, %c0_i32_0 : i32, i32
  }
  func.func @transform_16(%arg0: i32) -> (i32, i32) {
    %c0_i32 = arith.constant 0 : i32
    %c0_i32_0 = arith.constant 0 : i32
    %c0_i32_1 = arith.constant 0 : i32
    return %c0_i32, %c0_i32_0 : i32, i32
  }
  func.func @transform_17(%arg0: i32) -> (i32, i32) {
    %c0_i32 = arith.constant 0 : i32
    %c0_i32_0 = arith.constant 0 : i32
    %c0_i32_1 = arith.constant 0 : i32
    return %c0_i32, %c0_i32_0 : i32, i32
  }
  func.func @transform_18(%arg0: i32) -> (i32, i32) {
    %c0_i32 = arith.constant 0 : i32
    %c0_i32_0 = arith.constant 0 : i32
    %c0_i32_1 = arith.constant 0 : i32
    return %c0_i32, %c0_i32_0 : i32, i32
  }
  func.func @transform_19(%arg0: i32) -> (i32, i32) {
    %c0_i32 = arith.constant 0 : i32
    %c0_i32_0 = arith.constant 0 : i32
    %c0_i32_1 = arith.constant 0 : i32
    return %c0_i32, %c0_i32_0 : i32, i32
  }
  func.func @transform_20(%arg0: i32) -> (i32, i32, i32) {
    %c0_i32 = arith.constant 0 : i32
    %c0_i32_0 = arith.constant 0 : i32
    %c0_i32_1 = arith.constant 0 : i32
    return %arg0, %c0_i32, %c0_i32_0 : i32, i32, i32
  }
}

</mosaic_0001>

<llo_original>
// kernel: tpu_custom_call.1
$region0: #{tpu_custom_call.1}
  #allocation0 [shape = 'u32[]', space=smem, size = 0x4, offset = 0x4, fixed_abs, tag = 'smem constant byte address 0x4 - core index']
  #allocation1 [shape = 'u32[144,128]{1,0:T(1,128)}', space=vmem, size = 0x12000, scoped, tag = 'internal scratch']
  %s0 = inlined_call_operand.vmem [shape: f32[2,4,256], index: 0, kind: input, shape index: {}]
  %s1 = inlined_call_operand.vmem [shape: f32[256,64], index: 1, kind: input, shape index: {}]
  %s2 = inlined_call_operand.vmem [shape: f32[4,9], index: 2, kind: input, shape index: {}]
  %s3 = inlined_call_operand.vmem [shape: f32[4,1], index: 3, kind: input, shape index: {}]
  %s4 = inlined_call_operand.vmem [shape: f32[8,4], index: 4, kind: input, shape index: {}]
  %s5 = inlined_call_operand.vmem [shape: f32[8,1], index: 5, kind: input, shape index: {}]
  %s6 = inlined_call_operand.vmem [shape: f32[8,9], index: 6, kind: input, shape index: {}]
  %s7 = inlined_call_operand.vmem [shape: f32[8,1], index: 7, kind: input, shape index: {}]
  %s8 = inlined_call_operand.vmem [shape: f32[8,8], index: 8, kind: input, shape index: {}]
  %s9 = inlined_call_operand.vmem [shape: f32[8,1], index: 9, kind: input, shape index: {}]
  %s10 = inlined_call_operand.vmem [shape: f32[8,4], index: 10, kind: input, shape index: {}]
  %s11 = inlined_call_operand.vmem [shape: f32[8,1], index: 11, kind: input, shape index: {}]
  %s12 = inlined_call_operand.vmem [shape: f32[8,9], index: 12, kind: input, shape index: {}]
  %s13 = inlined_call_operand.vmem [shape: f32[8,1], index: 13, kind: input, shape index: {}]
  %s14 = inlined_call_operand.vmem [shape: f32[16,8], index: 14, kind: input, shape index: {}]
  %s15 = inlined_call_operand.vmem [shape: f32[16,1], index: 15, kind: input, shape index: {}]
  %s16 = inlined_call_operand.vmem [shape: f32[16,9], index: 16, kind: input, shape index: {}]
  %s17 = inlined_call_operand.vmem [shape: f32[16,1], index: 17, kind: input, shape index: {}]
  %s18 = inlined_call_operand.vmem [shape: f32[16,16], index: 18, kind: input, shape index: {}]
  %s19 = inlined_call_operand.vmem [shape: f32[16,1], index: 19, kind: input, shape index: {}]
  %s20 = inlined_call_operand.vmem [shape: f32[2,16,1], index: 20, kind: output, shape index: {}]
  %s21 = sld [smem:[#allocation0]]
  $region113: #{tpu_custom_call.1} parent=0
    _
  %s23 = ssub.s32 1, %s21
  %s24 = scalar_select 0, %s23, %s21
  loop: start=0, step=1, limit=4
  $region2: #{tpu_custom_call.1} parent=0 // loop_pre_header
    _
  $region3: #{tpu_custom_call.1} parent=0 // loop_header
    %s26 = sphi 0, %s30
    %p27 = scmp.ge.s32.totalorder %s26, 4
    %s36 = sphi 0, %s38
    %s39 = sphi 0, %s36
    %s40 = sphi 0, %s39
    %s56 = sphi 0, %s40
    %s60 = sphi 0, %s60
    %s62 = sphi 0, %s60
    %s63 = sphi 0, %s62
    %s77 = sphi 0, %s63
    %s81 = sphi 0, %s81
    %s83 = sphi 0, %s81
    %s84 = sphi 0, %s83
    %s98 = sphi 0, %s84
    %s102 = sphi 0, %s102
    %s104 = sphi 0, %s102
    %s105 = sphi 0, %s104
    %s119 = sphi 0, %s105
    %s123 = sphi 0, %s123
    %s125 = sphi 0, %s123
    %s126 = sphi 0, %s125
    %s140 = sphi 0, %s126
    %s144 = sphi 0, %s144
    %s146 = sphi 0, %s144
    %s147 = sphi 0, %s146
    %s161 = sphi 0, %s147
    %s165 = sphi 0, %s165
    %s167 = sphi 0, %s165
    %s168 = sphi 0, %s167
    %s182 = sphi 0, %s168
    %s186 = sphi 0, %s186
    %s188 = sphi 0, %s186
    %s189 = sphi 0, %s188
    %s203 = sphi 0, %s189
    %s207 = sphi 0, %s207
    %s209 = sphi 0, %s207
    %s210 = sphi 0, %s209
    %s224 = sphi 0, %s210
    %s228 = sphi 0, %s228
    %s230 = sphi 0, %s228
    %s231 = sphi 0, %s230
    %s245 = sphi 0, %s231
    %s249 = sphi 0, %s249
    %s251 = sphi 0, %s249
    %s252 = sphi 0, %s251
    %s266 = sphi 0, %s252
    %s270 = sphi 0, %s270
    %s272 = sphi 0, %s270
    %s273 = sphi 0, %s272
    %s287 = sphi 0, %s273
    %s291 = sphi 0, %s291
    %s293 = sphi 0, %s291
    %s294 = sphi 0, %s293
    %s308 = sphi 0, %s294
    %s312 = sphi 0, %s312
    %s314 = sphi 0, %s312
    %s315 = sphi 0, %s314
    %s329 = sphi 0, %s315
    %s333 = sphi 0, %s333
    %s335 = sphi 0, %s333
    %s336 = sphi 0, %s335
    %s350 = sphi 0, %s336
    %s354 = sphi 0, %s354
    %s356 = sphi 0, %s354
    %s357 = sphi 0, %s356
    %s371 = sphi 0, %s357
    %s375 = sphi 0, %s375
    %s377 = sphi 0, %s375
    %s378 = sphi 0, %s377
    %s392 = sphi 0, %s378
    %s396 = sphi 0, %s396
    %s398 = sphi 0, %s396
    %s399 = sphi 0, %s398
    %s413 = sphi 0, %s399
    %s417 = sphi 0, %s417
    %s419 = sphi 0, %s417
    %s420 = sphi 0, %s419
    %s434 = sphi 0, %s420
    %s438 = sphi 0, %s438
    %s440 = sphi 0, %s438
    %s441 = sphi 0, %s440
    %s455 = sphi 0, %s441
    %s461 = sphi 0, %s463
    %s464 = sphi 0, %s461
    %s465 = sphi 0, %s464
    %s481 = sphi 0, %s465
  $region4: #{tpu_custom_call.1} parent=0 // loop_header_branch
    %29 = sbr.rel (%p27) target = $region8
  $region5: #{tpu_custom_call.1} parent=0 // loop_body
    %s31 = ssub.s32 %s26, 1
    %s32 = ssub.s32 %s26, 2
    %s33 = sadd.s32 %s26, 1
    %s34 = ssub.s32 %s26, %s33
    %p35 = scmp.eq.s32.totalorder %s34, 0
    %s37 = sadd.s32 %s36, 1
    %s38 = scalar_select %p35, %s36, %s37
    %p41 = pneg %p35
    %p42 = scmp.eq.s32.totalorder %s26, 1
    %p43 = por %p41, %p42
    %p44 = scmp.ne.s32.totalorder %s36, %s39
    %p45 = scmp.eq.s32.totalorder %s26, 0
    %p46 = por %p44, %p45
    %p47 = scmp.ne.s32.totalorder %s36, %s39
    %p48 = scmp.eq.s32.totalorder %s31, 1
    %p49 = por %p47, %p48
    %p50 = scmp.ne.s32.totalorder %s39, %s40
    %p51 = scmp.eq.s32.totalorder %s31, 0
    %p52 = por %p50, %p51
    %p53 = scmp.ne.s32.totalorder %s39, %s40
    %p54 = scmp.eq.s32.totalorder %s32, 1
    %p55 = por %p53, %p54
    %p57 = scmp.ne.s32.totalorder %s40, %s56
    %p58 = scmp.eq.s32.totalorder %s32, 0
    %p59 = por %p57, %p58
    %s61 = sadd.s32 %s60, 1
    %p64 = scmp.eq.s32.totalorder %s26, 1
    %p65 = scmp.ne.s32.totalorder %s60, %s62
    %p66 = scmp.eq.s32.totalorder %s26, 0
    %p67 = por %p65, %p66
    %p68 = scmp.ne.s32.totalorder %s60, %s62
    %p69 = scmp.eq.s32.totalorder %s31, 1
    %p70 = por %p68, %p69
    %p71 = scmp.ne.s32.totalorder %s62, %s63
    %p72 = scmp.eq.s32.totalorder %s31, 0
    %p73 = por %p71, %p72
    %p74 = scmp.ne.s32.totalorder %s62, %s63
    %p75 = scmp.eq.s32.totalorder %s32, 1
    %p76 = por %p74, %p75
    %p78 = scmp.ne.s32.totalorder %s63, %s77
    %p79 = scmp.eq.s32.totalorder %s32, 0
    %p80 = por %p78, %p79
    %s82 = sadd.s32 %s81, 1
    %p85 = scmp.eq.s32.totalorder %s26, 1
    %p86 = scmp.ne.s32.totalorder %s81, %s83
    %p87 = scmp.eq.s32.totalorder %s26, 0
    %p88 = por %p86, %p87
    %p89 = scmp.ne.s32.totalorder %s81, %s83
    %p90 = scmp.eq.s32.totalorder %s31, 1
    %p91 = por %p89, %p90
    %p92 = scmp.ne.s32.totalorder %s83, %s84
    %p93 = scmp.eq.s32.totalorder %s31, 0
    %p94 = por %p92, %p93
    %p95 = scmp.ne.s32.totalorder %s83, %s84
    %p96 = scmp.eq.s32.totalorder %s32, 1
    %p97 = por %p95, %p96
    %p99 = scmp.ne.s32.totalorder %s84, %s98
    %p100 = scmp.eq.s32.totalorder %s32, 0
    %p101 = por %p99, %p100
    %s103 = sadd.s32 %s102, 1
    %p106 = scmp.eq.s32.totalorder %s26, 1
    %p107 = scmp.ne.s32.totalorder %s102, %s104
    %p108 = scmp.eq.s32.totalorder %s26, 0
    %p109 = por %p107, %p108
    %p110 = scmp.ne.s32.totalorder %s102, %s104
    %p111 = scmp.eq.s32.totalorder %s31, 1
    %p112 = por %p110, %p111
    %p113 = scmp.ne.s32.totalorder %s104, %s105
    %p114 = scmp.eq.s32.totalorder %s31, 0
    %p115 = por %p113, %p114
    %p116 = scmp.ne.s32.totalorder %s104, %s105
    %p117 = scmp.eq.s32.totalorder %s32, 1
    %p118 = por %p116, %p117
    %p120 = scmp.ne.s32.totalorder %s105, %s119
    %p121 = scmp.eq.s32.totalorder %s32, 0
    %p122 = por %p120, %p121
    %s124 = sadd.s32 %s123, 1
    %p127 = scmp.eq.s32.totalorder %s26, 1
    %p128 = scmp.ne.s32.totalorder %s123, %s125
    %p129 = scmp.eq.s32.totalorder %s26, 0
    %p130 = por %p128, %p129
    %p131 = scmp.ne.s32.totalorder %s123, %s125
    %p132 = scmp.eq.s32.totalorder %s31, 1
    %p133 = por %p131, %p132
    %p134 = scmp.ne.s32.totalorder %s125, %s126
    %p135 = scmp.eq.s32.totalorder %s31, 0
    %p136 = por %p134, %p135
    %p137 = scmp.ne.s32.totalorder %s125, %s126
    %p138 = scmp.eq.s32.totalorder %s32, 1
    %p139 = por %p137, %p138
    %p141 = scmp.ne.s32.totalorder %s126, %s140
    %p142 = scmp.eq.s32.totalorder %s32, 0
    %p143 = por %p141, %p142
    %s145 = sadd.s32 %s144, 1
    %p148 = scmp.eq.s32.totalorder %s26, 1
    %p149 = scmp.ne.s32.totalorder %s144, %s146
    %p150 = scmp.eq.s32.totalorder %s26, 0
    %p151 = por %p149, %p150
    %p152 = scmp.ne.s32.totalorder %s144, %s146
    %p153 = scmp.eq.s32.totalorder %s31, 1
    %p154 = por %p152, %p153
    %p155 = scmp.ne.s32.totalorder %s146, %s147
    %p156 = scmp.eq.s32.totalorder %s31, 0
    %p157 = por %p155, %p156
    %p158 = scmp.ne.s32.totalorder %s146, %s147
    %p159 = scmp.eq.s32.totalorder %s32, 1
    %p160 = por %p158, %p159
    %p162 = scmp.ne.s32.totalorder %s147, %s161
    %p163 = scmp.eq.s32.totalorder %s32, 0
    %p164 = por %p162, %p163
    %s166 = sadd.s32 %s165, 1
    %p169 = scmp.eq.s32.totalorder %s26, 1
    %p170 = scmp.ne.s32.totalorder %s165, %s167
    %p171 = scmp.eq.s32.totalorder %s26, 0
    %p172 = por %p170, %p171
    %p173 = scmp.ne.s32.totalorder %s165, %s167
    %p174 = scmp.eq.s32.totalorder %s31, 1
    %p175 = por %p173, %p174
    %p176 = scmp.ne.s32.totalorder %s167, %s168
    %p177 = scmp.eq.s32.totalorder %s31, 0
    %p178 = por %p176, %p177
    %p179 = scmp.ne.s32.totalorder %s167, %s168
    %p180 = scmp.eq.s32.totalorder %s32, 1
    %p181 = por %p179, %p180
    %p183 = scmp.ne.s32.totalorder %s168, %s182
    %p184 = scmp.eq.s32.totalorder %s32, 0
    %p185 = por %p183, %p184
    %s187 = sadd.s32 %s186, 1
    %p190 = scmp.eq.s32.totalorder %s26, 1
    %p191 = scmp.ne.s32.totalorder %s186, %s188
    %p192 = scmp.eq.s32.totalorder %s26, 0
    %p193 = por %p191, %p192
    %p194 = scmp.ne.s32.totalorder %s186, %s188
    %p195 = scmp.eq.s32.totalorder %s31, 1
    %p196 = por %p194, %p195
    %p197 = scmp.ne.s32.totalorder %s188, %s189
    %p198 = scmp.eq.s32.totalorder %s31, 0
    %p199 = por %p197, %p198
    %p200 = scmp.ne.s32.totalorder %s188, %s189
    %p201 = scmp.eq.s32.totalorder %s32, 1
    %p202 = por %p200, %p201
    %p204 = scmp.ne.s32.totalorder %s189, %s203
    %p205 = scmp.eq.s32.totalorder %s32, 0
    %p206 = por %p204, %p205
    %s208 = sadd.s32 %s207, 1
    %p211 = scmp.eq.s32.totalorder %s26, 1
    %p212 = scmp.ne.s32.totalorder %s207, %s209
    %p213 = scmp.eq.s32.totalorder %s26, 0
    %p214 = por %p212, %p213
    %p215 = scmp.ne.s32.totalorder %s207, %s209
    %p216 = scmp.eq.s32.totalorder %s31, 1
    %p217 = por %p215, %p216
    %p218 = scmp.ne.s32.totalorder %s209, %s210
    %p219 = scmp.eq.s32.totalorder %s31, 0
    %p220 = por %p218, %p219
    %p221 = scmp.ne.s32.totalorder %s209, %s210
    %p222 = scmp.eq.s32.totalorder %s32, 1
    %p223 = por %p221, %p222
    %p225 = scmp.ne.s32.totalorder %s210, %s224
    %p226 = scmp.eq.s32.totalorder %s32, 0
    %p227 = por %p225, %p226
    %s229 = sadd.s32 %s228, 1
    %p232 = scmp.eq.s32.totalorder %s26, 1
    %p233 = scmp.ne.s32.totalorder %s228, %s230
    %p234 = scmp.eq.s32.totalorder %s26, 0
    %p235 = por %p233, %p234
    %p236 = scmp.ne.s32.totalorder %s228, %s230
    %p237 = scmp.eq.s32.totalorder %s31, 1
    %p238 = por %p236, %p237
    %p239 = scmp.ne.s32.totalorder %s230, %s231
    %p240 = scmp.eq.s32.totalorder %s31, 0
    %p241 = por %p239, %p240
    %p242 = scmp.ne.s32.totalorder %s230, %s231
    %p243 = scmp.eq.s32.totalorder %s32, 1
    %p244 = por %p242, %p243
    %p246 = scmp.ne.s32.totalorder %s231, %s245
    %p247 = scmp.eq.s32.totalorder %s32, 0
    %p248 = por %p246, %p247
    %s250 = sadd.s32 %s249, 1
    %p253 = scmp.eq.s32.totalorder %s26, 1
    %p254 = scmp.ne.s32.totalorder %s249, %s251
    %p255 = scmp.eq.s32.totalorder %s26, 0
    %p256 = por %p254, %p255
    %p257 = scmp.ne.s32.totalorder %s249, %s251
    %p258 = scmp.eq.s32.totalorder %s31, 1
    %p259 = por %p257, %p258
    %p260 = scmp.ne.s32.totalorder %s251, %s252
    %p261 = scmp.eq.s32.totalorder %s31, 0
    %p262 = por %p260, %p261
    %p263 = scmp.ne.s32.totalorder %s251, %s252
    %p264 = scmp.eq.s32.totalorder %s32, 1
    %p265 = por %p263, %p264
    %p267 = scmp.ne.s32.totalorder %s252, %s266
    %p268 = scmp.eq.s32.totalorder %s32, 0
    %p269 = por %p267, %p268
    %s271 = sadd.s32 %s270, 1
    %p274 = scmp.eq.s32.totalorder %s26, 1
    %p275 = scmp.ne.s32.totalorder %s270, %s272
    %p276 = scmp.eq.s32.totalorder %s26, 0
    %p277 = por %p275, %p276
    %p278 = scmp.ne.s32.totalorder %s270, %s272
    %p279 = scmp.eq.s32.totalorder %s31, 1
    %p280 = por %p278, %p279
    %p281 = scmp.ne.s32.totalorder %s272, %s273
    %p282 = scmp.eq.s32.totalorder %s31, 0
    %p283 = por %p281, %p282
    %p284 = scmp.ne.s32.totalorder %s272, %s273
    %p285 = scmp.eq.s32.totalorder %s32, 1
    %p286 = por %p284, %p285
    %p288 = scmp.ne.s32.totalorder %s273, %s287
    %p289 = scmp.eq.s32.totalorder %s32, 0
    %p290 = por %p288, %p289
    %s292 = sadd.s32 %s291, 1
    %p295 = scmp.eq.s32.totalorder %s26, 1
    %p296 = scmp.ne.s32.totalorder %s291, %s293
    %p297 = scmp.eq.s32.totalorder %s26, 0
    %p298 = por %p296, %p297
    %p299 = scmp.ne.s32.totalorder %s291, %s293
    %p300 = scmp.eq.s32.totalorder %s31, 1
    %p301 = por %p299, %p300
    %p302 = scmp.ne.s32.totalorder %s293, %s294
    %p303 = scmp.eq.s32.totalorder %s31, 0
    %p304 = por %p302, %p303
    %p305 = scmp.ne.s32.totalorder %s293, %s294
    %p306 = scmp.eq.s32.totalorder %s32, 1
    %p307 = por %p305, %p306
    %p309 = scmp.ne.s32.totalorder %s294, %s308
    %p310 = scmp.eq.s32.totalorder %s32, 0
    %p311 = por %p309, %p310
    %s313 = sadd.s32 %s312, 1
    %p316 = scmp.eq.s32.totalorder %s26, 1
    %p317 = scmp.ne.s32.totalorder %s312, %s314
    %p318 = scmp.eq.s32.totalorder %s26, 0
    %p319 = por %p317, %p318
    %p320 = scmp.ne.s32.totalorder %s312, %s314
    %p321 = scmp.eq.s32.totalorder %s31, 1
    %p322 = por %p320, %p321
    %p323 = scmp.ne.s32.totalorder %s314, %s315
    %p324 = scmp.eq.s32.totalorder %s31, 0
    %p325 = por %p323, %p324
    %p326 = scmp.ne.s32.totalorder %s314, %s315
    %p327 = scmp.eq.s32.totalorder %s32, 1
    %p328 = por %p326, %p327
    %p330 = scmp.ne.s32.totalorder %s315, %s329
    %p331 = scmp.eq.s32.totalorder %s32, 0
    %p332 = por %p330, %p331
    %s334 = sadd.s32 %s333, 1
    %p337 = scmp.eq.s32.totalorder %s26, 1
    %p338 = scmp.ne.s32.totalorder %s333, %s335
    %p339 = scmp.eq.s32.totalorder %s26, 0
    %p340 = por %p338, %p339
    %p341 = scmp.ne.s32.totalorder %s333, %s335
    %p342 = scmp.eq.s32.totalorder %s31, 1
    %p343 = por %p341, %p342
    %p344 = scmp.ne.s32.totalorder %s335, %s336
    %p345 = scmp.eq.s32.totalorder %s31, 0
    %p346 = por %p344, %p345
    %p347 = scmp.ne.s32.totalorder %s335, %s336
    %p348 = scmp.eq.s32.totalorder %s32, 1
    %p349 = por %p347, %p348
    %p351 = scmp.ne.s32.totalorder %s336, %s350
    %p352 = scmp.eq.s32.totalorder %s32, 0
    %p353 = por %p351, %p352
    %s355 = sadd.s32 %s354, 1
    %p358 = scmp.eq.s32.totalorder %s26, 1
    %p359 = scmp.ne.s32.totalorder %s354, %s356
    %p360 = scmp.eq.s32.totalorder %s26, 0
    %p361 = por %p359, %p360
    %p362 = scmp.ne.s32.totalorder %s354, %s356
    %p363 = scmp.eq.s32.totalorder %s31, 1
    %p364 = por %p362, %p363
    %p365 = scmp.ne.s32.totalorder %s356, %s357
    %p366 = scmp.eq.s32.totalorder %s31, 0
    %p367 = por %p365, %p366
    %p368 = scmp.ne.s32.totalorder %s356, %s357
    %p369 = scmp.eq.s32.totalorder %s32, 1
    %p370 = por %p368, %p369
    %p372 = scmp.ne.s32.totalorder %s357, %s371
    %p373 = scmp.eq.s32.totalorder %s32, 0
    %p374 = por %p372, %p373
    %s376 = sadd.s32 %s375, 1
    %p379 = scmp.eq.s32.totalorder %s26, 1
    %p380 = scmp.ne.s32.totalorder %s375, %s377
    %p381 = scmp.eq.s32.totalorder %s26, 0
    %p382 = por %p380, %p381
    %p383 = scmp.ne.s32.totalorder %s375, %s377
    %p384 = scmp.eq.s32.totalorder %s31, 1
    %p385 = por %p383, %p384
    %p386 = scmp.ne.s32.totalorder %s377, %s378
    %p387 = scmp.eq.s32.totalorder %s31, 0
    %p388 = por %p386, %p387
    %p389 = scmp.ne.s32.totalorder %s377, %s378
    %p390 = scmp.eq.s32.totalorder %s32, 1
    %p391 = por %p389, %p390
    %p393 = scmp.ne.s32.totalorder %s378, %s392
    %p394 = scmp.eq.s32.totalorder %s32, 0
    %p395 = por %p393, %p394
    %s397 = sadd.s32 %s396, 1
    %p400 = scmp.eq.s32.totalorder %s26, 1
    %p401 = scmp.ne.s32.totalorder %s396, %s398
    %p402 = scmp.eq.s32.totalorder %s26, 0
    %p403 = por %p401, %p402
    %p404 = scmp.ne.s32.totalorder %s396, %s398
    %p405 = scmp.eq.s32.totalorder %s31, 1
    %p406 = por %p404, %p405
    %p407 = scmp.ne.s32.totalorder %s398, %s399
    %p408 = scmp.eq.s32.totalorder %s31, 0
    %p409 = por %p407, %p408
    %p410 = scmp.ne.s32.totalorder %s398, %s399
    %p411 = scmp.eq.s32.totalorder %s32, 1
    %p412 = por %p410, %p411
    %p414 = scmp.ne.s32.totalorder %s399, %s413
    %p415 = scmp.eq.s32.totalorder %s32, 0
    %p416 = por %p414, %p415
    %s418 = sadd.s32 %s417, 1
    %p421 = scmp.eq.s32.totalorder %s26, 1
    %p422 = scmp.ne.s32.totalorder %s417, %s419
    %p423 = scmp.eq.s32.totalorder %s26, 0
    %p424 = por %p422, %p423
    %p425 = scmp.ne.s32.totalorder %s417, %s419
    %p426 = scmp.eq.s32.totalorder %s31, 1
    %p427 = por %p425, %p426
    %p428 = scmp.ne.s32.totalorder %s419, %s420
    %p429 = scmp.eq.s32.totalorder %s31, 0
    %p430 = por %p428, %p429
    %p431 = scmp.ne.s32.totalorder %s419, %s420
    %p432 = scmp.eq.s32.totalorder %s32, 1
    %p433 = por %p431, %p432
    %p435 = scmp.ne.s32.totalorder %s420, %s434
    %p436 = scmp.eq.s32.totalorder %s32, 0
    %p437 = por %p435, %p436
    %s439 = sadd.s32 %s438, 1
    %p442 = scmp.eq.s32.totalorder %s26, 1
    %p443 = scmp.ne.s32.totalorder %s438, %s440
    %p444 = scmp.eq.s32.totalorder %s26, 0
    %p445 = por %p443, %p444
    %p446 = scmp.ne.s32.totalorder %s438, %s440
    %p447 = scmp.eq.s32.totalorder %s31, 1
    %p448 = por %p446, %p447
    %p449 = scmp.ne.s32.totalorder %s440, %s441
    %p450 = scmp.eq.s32.totalorder %s31, 0
    %p451 = por %p449, %p450
    %p452 = scmp.ne.s32.totalorder %s440, %s441
    %p453 = scmp.eq.s32.totalorder %s32, 1
    %p454 = por %p452, %p453
    %p456 = scmp.ne.s32.totalorder %s441, %s455
    %p457 = scmp.eq.s32.totalorder %s32, 0
    %p458 = por %p456, %p457
    %s459 = ssub.s32 %s26, %s33
    %p460 = scmp.eq.s32.totalorder %s459, 0
    %s462 = sadd.s32 %s461, 1
    %s463 = scalar_select %p460, %s461, %s462
    %p466 = pneg %p460
    %p467 = scmp.eq.s32.totalorder %s26, 1
    %p468 = por %p466, %p467
    %p469 = scmp.ne.s32.totalorder %s461, %s464
    %p470 = scmp.eq.s32.totalorder %s26, 0
    %p471 = por %p469, %p470
    %p472 = scmp.ne.s32.totalorder %s461, %s464
    %p473 = scmp.eq.s32.totalorder %s31, 1
    %p474 = por %p472, %p473
    %p475 = scmp.ne.s32.totalorder %s464, %s465
    %p476 = scmp.eq.s32.totalorder %s31, 0
    %p477 = por %p475, %p476
    %p478 = scmp.ne.s32.totalorder %s464, %s465
    %p479 = scmp.eq.s32.totalorder %s32, 1
    %p480 = por %p478, %p479
    %p482 = scmp.ne.s32.totalorder %s465, %s481
    %p483 = scmp.eq.s32.totalorder %s32, 0
    %p484 = por %p482, %p483
    %p485 = scmp.le.s32.totalorder 1, %s26
    %p486 = scmp.lt.s32.totalorder %s26, 3
    %p487 = pnand %p485, %p486
    %p488 = pneg %p487
    // Predicated region
    $region9: #{tpu_custom_call.1} parent=5 // pred_check
      _
    $region10: #{tpu_custom_call.1} parent=5 // pred_check_branch
      %490 = sbr.rel (%p487) target = $region12
    $region11: #{tpu_custom_call.1} parent=5 // pred_region
      %s491 = ssub.s32 %s26, 1
      // Predicated region
      $region13: #{tpu_custom_call.1} parent=11 // pred_check
        %p492 = pneg %p73
      $region14: #{tpu_custom_call.1} parent=11 // pred_check_branch
        %494 = sbr.rel (%p492) target = $region16
      $region15: #{tpu_custom_call.1} parent=11 // pred_region
        _
      $region16: #{tpu_custom_call.1} parent=11 // pred_fallthru
        _
      // Predicated region
      $region17: #{tpu_custom_call.1} parent=11 // pred_check
        %p495 = pneg %p94
      $region18: #{tpu_custom_call.1} parent=11 // pred_check_branch
        %497 = sbr.rel (%p495) target = $region20
      $region19: #{tpu_custom_call.1} parent=11 // pred_region
        _
      $region20: #{tpu_custom_call.1} parent=11 // pred_fallthru
        _
      // Predicated region
      $region21: #{tpu_custom_call.1} parent=11 // pred_check
        %p498 = pneg %p115
      $region22: #{tpu_custom_call.1} parent=11 // pred_check_branch
        %500 = sbr.rel (%p498) target = $region24
      $region23: #{tpu_custom_call.1} parent=11 // pred_region
        _
      $region24: #{tpu_custom_call.1} parent=11 // pred_fallthru
        _
      // Predicated region
      $region25: #{tpu_custom_call.1} parent=11 // pred_check
        %p501 = pneg %p136
      $region26: #{tpu_custom_call.1} parent=11 // pred_check_branch
        %503 = sbr.rel (%p501) target = $region28
      $region27: #{tpu_custom_call.1} parent=11 // pred_region
        _
      $region28: #{tpu_custom_call.1} parent=11 // pred_fallthru
        _
      // Predicated region
      $region29: #{tpu_custom_call.1} parent=11 // pred_check
        %p504 = pneg %p157
      $region30: #{tpu_custom_call.1} parent=11 // pred_check_branch
        %506 = sbr.rel (%p504) target = $region32
      $region31: #{tpu_custom_call.1} parent=11 // pred_region
        _
      $region32: #{tpu_custom_call.1} parent=11 // pred_fallthru
        _
      // Predicated region
      $region33: #{tpu_custom_call.1} parent=11 // pred_check
        %p507 = pneg %p178
      $region34: #{tpu_custom_call.1} parent=11 // pred_check_branch
        %509 = sbr.rel (%p507) target = $region36
      $region35: #{tpu_custom_call.1} parent=11 // pred_region
        _
      $region36: #{tpu_custom_call.1} parent=11 // pred_fallthru
        _
      // Predicated region
      $region37: #{tpu_custom_call.1} parent=11 // pred_check
        %p510 = pneg %p199
      $region38: #{tpu_custom_call.1} parent=11 // pred_check_branch
        %512 = sbr.rel (%p510) target = $region40
      $region39: #{tpu_custom_call.1} parent=11 // pred_region
        _
      $region40: #{tpu_custom_call.1} parent=11 // pred_fallthru
        _
      // Predicated region
      $region41: #{tpu_custom_call.1} parent=11 // pred_check
        %p513 = pneg %p220
      $region42: #{tpu_custom_call.1} parent=11 // pred_check_branch
        %515 = sbr.rel (%p513) target = $region44
      $region43: #{tpu_custom_call.1} parent=11 // pred_region
        _
      $region44: #{tpu_custom_call.1} parent=11 // pred_fallthru
        _
      // Predicated region
      $region45: #{tpu_custom_call.1} parent=11 // pred_check
        %p516 = pneg %p241
      $region46: #{tpu_custom_call.1} parent=11 // pred_check_branch
        %518 = sbr.rel (%p516) target = $region48
      $region47: #{tpu_custom_call.1} parent=11 // pred_region
        _
      $region48: #{tpu_custom_call.1} parent=11 // pred_fallthru
        _
      // Predicated region
      $region49: #{tpu_custom_call.1} parent=11 // pred_check
        %p519 = pneg %p262
      $region50: #{tpu_custom_call.1} parent=11 // pred_check_branch
        %521 = sbr.rel (%p519) target = $region52
      $region51: #{tpu_custom_call.1} parent=11 // pred_region
        _
      $region52: #{tpu_custom_call.1} parent=11 // pred_fallthru
        _
      // Predicated region
      $region53: #{tpu_custom_call.1} parent=11 // pred_check
        %p522 = pneg %p283
      $region54: #{tpu_custom_call.1} parent=11 // pred_check_branch
        %524 = sbr.rel (%p522) target = $region56
      $region55: #{tpu_custom_call.1} parent=11 // pred_region
        _
      $region56: #{tpu_custom_call.1} parent=11 // pred_fallthru
        _
      // Predicated region
      $region57: #{tpu_custom_call.1} parent=11 // pred_check
        %p525 = pneg %p304
      $region58: #{tpu_custom_call.1} parent=11 // pred_check_branch
        %527 = sbr.rel (%p525) target = $region60
      $region59: #{tpu_custom_call.1} parent=11 // pred_region
        _
      $region60: #{tpu_custom_call.1} parent=11 // pred_fallthru
        _
      // Predicated region
      $region61: #{tpu_custom_call.1} parent=11 // pred_check
        %p528 = pneg %p325
      $region62: #{tpu_custom_call.1} parent=11 // pred_check_branch
        %530 = sbr.rel (%p528) target = $region64
      $region63: #{tpu_custom_call.1} parent=11 // pred_region
        _
      $region64: #{tpu_custom_call.1} parent=11 // pred_fallthru
        _
      // Predicated region
      $region65: #{tpu_custom_call.1} parent=11 // pred_check
        %p531 = pneg %p346
      $region66: #{tpu_custom_call.1} parent=11 // pred_check_branch
        %533 = sbr.rel (%p531) target = $region68
      $region67: #{tpu_custom_call.1} parent=11 // pred_region
        _
      $region68: #{tpu_custom_call.1} parent=11 // pred_fallthru
        _
      // Predicated region
      $region69: #{tpu_custom_call.1} parent=11 // pred_check
        %p534 = pneg %p367
      $region70: #{tpu_custom_call.1} parent=11 // pred_check_branch
        %536 = sbr.rel (%p534) target = $region72
      $region71: #{tpu_custom_call.1} parent=11 // pred_region
        _
      $region72: #{tpu_custom_call.1} parent=11 // pred_fallthru
        _
      // Predicated region
      $region73: #{tpu_custom_call.1} parent=11 // pred_check
        %p537 = pneg %p388
      $region74: #{tpu_custom_call.1} parent=11 // pred_check_branch
        %539 = sbr.rel (%p537) target = $region76
      $region75: #{tpu_custom_call.1} parent=11 // pred_region
        _
      $region76: #{tpu_custom_call.1} parent=11 // pred_fallthru
        _
      // Predicated region
      $region77: #{tpu_custom_call.1} parent=11 // pred_check
        %p540 = pneg %p409
      $region78: #{tpu_custom_call.1} parent=11 // pred_check_branch
        %542 = sbr.rel (%p540) target = $region80
      $region79: #{tpu_custom_call.1} parent=11 // pred_region
        _
      $region80: #{tpu_custom_call.1} parent=11 // pred_fallthru
        _
      // Predicated region
      $region81: #{tpu_custom_call.1} parent=11 // pred_check
        %p543 = pneg %p430
      $region82: #{tpu_custom_call.1} parent=11 // pred_check_branch
        %545 = sbr.rel (%p543) target = $region84
      $region83: #{tpu_custom_call.1} parent=11 // pred_region
        _
      $region84: #{tpu_custom_call.1} parent=11 // pred_fallthru
        _
      // Predicated region
      $region85: #{tpu_custom_call.1} parent=11 // pred_check
        %p546 = pneg %p451
      $region86: #{tpu_custom_call.1} parent=11 // pred_check_branch
        %548 = sbr.rel (%p546) target = $region88
      $region87: #{tpu_custom_call.1} parent=11 // pred_region
        _
      $region88: #{tpu_custom_call.1} parent=11 // pred_fallthru
        _
    $region12: #{tpu_custom_call.1} parent=5 // pred_fallthru
      _
    %p549 = scmp.lt.s32.totalorder %s26, 2
    // Predicated region
    $region89: #{tpu_custom_call.1} parent=5 // pred_check
      %p550 = pneg %p549
    $region90: #{tpu_custom_call.1} parent=5 // pred_check_branch
      %552 = sbr.rel (%p550) target = $region92
    $region91: #{tpu_custom_call.1} parent=5 // pred_region
      // Predicated region
      $region93: #{tpu_custom_call.1} parent=91 // pred_check
        %p553 = pneg %p46
      $region94: #{tpu_custom_call.1} parent=91 // pred_check_branch
        %555 = sbr.rel (%p553) target = $region96
      $region95: #{tpu_custom_call.1} parent=91 // pred_region
        %p556 = scmp.lt.s32.totalorder %s26, 1
        %s557 = scalar_select %p556, %s26, 1
        %s558 = smul.addr %s557, 2
        %s559 = smul.addr %s558, 4
        %s560 = scalar_lea.vmem %s0, %s559
      $region96: #{tpu_custom_call.1} parent=91 // pred_fallthru
        _
    $region92: #{tpu_custom_call.1} parent=5 // pred_fallthru
      _
    %p561 = scmp.le.s32.totalorder 1, %s26
    %p562 = scmp.lt.s32.totalorder %s26, 3
    %p563 = pnand %p561, %p562
    %p564 = pneg %p563
    // Predicated region
    $region97: #{tpu_custom_call.1} parent=5 // pred_check
      _
    $region98: #{tpu_custom_call.1} parent=5 // pred_check_branch
      %566 = sbr.rel (%p563) target = $region100
    $region99: #{tpu_custom_call.1} parent=5 // pred_region
      %s567 = ssub.s32 %s26, 1
      %p568 = scmp.lt.s32.totalorder %s31, 1
      %s569 = scalar_select %p568, %s31, 1
      %s570 = smul.addr %s569, 2
      %s571 = smul.addr %s570, 4
      %s572 = scalar_lea.vmem %s0, %s571
      %p573 = pneg %p52
      %p574 = pneg %p49
      %p575 = pneg %p73
      %p576 = pneg %p70
      %p577 = pneg %p94
      %p578 = pneg %p91
      %p579 = pneg %p115
      %p580 = pneg %p112
      %p581 = pneg %p136
      %p582 = pneg %p133
      %p583 = pneg %p157
      %p584 = pneg %p154
      %p585 = pneg %p178
      %p586 = pneg %p175
      %p587 = pneg %p199
      %p588 = pneg %p196
      %p589 = pneg %p220
      %p590 = pneg %p217
      %p591 = pneg %p241
      %p592 = pneg %p238
      %p593 = pneg %p262
      %p594 = pneg %p259
      %p595 = pneg %p283
      %p596 = pneg %p280
      %p597 = pneg %p304
      %p598 = pneg %p301
      %p599 = pneg %p325
      %p600 = pneg %p322
      %p601 = pneg %p346
      %p602 = pneg %p343
      %p603 = pneg %p367
      %p604 = pneg %p364
      %p605 = pneg %p388
      %p606 = pneg %p385
      %p607 = pneg %p409
      %p608 = pneg %p406
      %p609 = pneg %p430
      %p610 = pneg %p427
      %p611 = pneg %p451
      %p612 = pneg %p448
      %p613 = pneg %p477
      %p614 = pneg %p474
      %p615 = scmp.lt.s32.totalorder %s31, 1
      %s616 = scalar_select %p615, %s31, 1
      %s617 = smul.addr %s616, 2
      %s618 = smul.addr %s617, 8
      %s619 = scalar_lea.vmem %s20, %s618
      %p620 = scmp.lt.s32.totalorder %s31, 1
      %s621 = scalar_select %p620, %s31, 1
      %s622 = smul.addr %s621, 2
      %s623 = smul.addr %s622, 4
      %s624 = scalar_lea.vmem %s0, %s623
      %p625 = scmp.lt.s32.totalorder %s31, 1
      %s626 = scalar_select %p625, %s31, 1
      %s627 = smul.addr %s626, 2
      %s628 = smul.addr %s627, 8
      %s629 = scalar_lea.vmem %s20, %s628
      %v630 = vld [vmem:[%s624] sm:$0xff]
      %v631 = vld [vmem:[%s1] sm:$0xff]
      %v632 = vld [vmem:[%s1 + $0x8] sm:$0xff]
      %v633 = vld [vmem:[%s1 + $0x10] sm:$0xff]
      %v634 = vld [vmem:[%s1 + $0x18] sm:$0xff]
      %v635 = vld [vmem:[%s1 + $0x20] sm:$0xff]
      %v636 = vld [vmem:[%s1 + $0x28] sm:$0xff]
      %v637 = vld [vmem:[%s1 + $0x30] sm:$0xff]
      %v638 = vld [vmem:[%s1 + $0x38] sm:$0xff]
      %v639 = vld [vmem:[%s1 + $0x40] sm:$0xff]
      %v640 = vld [vmem:[%s1 + $0x48] sm:$0xff]
      %v641 = vld [vmem:[%s1 + $0x50] sm:$0xff]
      %v642 = vld [vmem:[%s1 + $0x58] sm:$0xff]
      %v643 = vld [vmem:[%s1 + $0x60] sm:$0xff]
      %v644 = vld [vmem:[%s1 + $0x68] sm:$0xff]
      %v645 = vld [vmem:[%s1 + $0x70] sm:$0xff]
      %v646 = vld [vmem:[%s1 + $0x78] sm:$0xff]
      %v647 = vld [vmem:[%s1 + $0x80] sm:$0xff]
      %v648 = vld [vmem:[%s1 + $0x88] sm:$0xff]
      %v649 = vld [vmem:[%s1 + $0x90] sm:$0xff]
      %v650 = vld [vmem:[%s1 + $0x98] sm:$0xff]
      %v651 = vld [vmem:[%s1 + $0xa0] sm:$0xff]
      %v652 = vld [vmem:[%s1 + $0xa8] sm:$0xff]
      %v653 = vld [vmem:[%s1 + $0xb0] sm:$0xff]
      %v654 = vld [vmem:[%s1 + $0xb8] sm:$0xff]
      %v655 = vld [vmem:[%s1 + $0xc0] sm:$0xff]
      %v656 = vld [vmem:[%s1 + $0xc8] sm:$0xff]
      %v657 = vld [vmem:[%s1 + $0xd0] sm:$0xff]
      %v658 = vld [vmem:[%s1 + $0xd8] sm:$0xff]
      %v659 = vld [vmem:[%s1 + $0xe0] sm:$0xff]
      %v660 = vld [vmem:[%s1 + $0xe8] sm:$0xff]
      %v661 = vld [vmem:[%s1 + $0xf0] sm:$0xff]
      %v662 = vld [vmem:[%s1 + $0xf8] sm:$0xff]
      %v664 = vcombine.high %v630, %v630
      %666 = vmatprep.subr.mxu0 0.0
      %667 = vmatpush1.msra.mxu0 %v631
      %668 = vmatprep.subr.mxu0 0.0
      %669 = vmatpush1.msra.mxu0 %v632
      %670 = vmatprep.subr.mxu0 0.0
      %671 = vmatpush1.msra.mxu0 %v633
      %672 = vmatprep.subr.mxu0 0.0
      %673 = vmatpush1.msra.mxu0 %v634
      %674 = vmatprep.subr.mxu0 0.0
      %675 = vmatpush1.msra.mxu0 %v635
      %676 = vmatprep.subr.mxu0 0.0
      %677 = vmatpush1.msra.mxu0 %v636
      %678 = vmatprep.subr.mxu0 0.0
      %679 = vmatpush1.msra.mxu0 %v637
      %680 = vmatprep.subr.mxu0 0.0
      %681 = vmatpush1.msra.mxu0 %v638
      %682 = vmatprep.subr.mxu0 0.0
      %683 = vmatpush1.msra.mxu0 %v639
      %684 = vmatprep.subr.mxu0 0.0
      %685 = vmatpush1.msra.mxu0 %v640
      %686 = vmatprep.subr.mxu0 0.0
      %687 = vmatpush1.msra.mxu0 %v641
      %688 = vmatprep.subr.mxu0 0.0
      %689 = vmatpush1.msra.mxu0 %v642
      %690 = vmatprep.subr.mxu0 0.0
      %691 = vmatpush1.msra.mxu0 %v643
      %692 = vmatprep.subr.mxu0 0.0
      %693 = vmatpush1.msra.mxu0 %v644
      %694 = vmatprep.subr.mxu0 0.0
      %695 = vmatpush1.msra.mxu0 %v645
      %696 = vmatprep.subr.mxu0 0.0
      %697 = vmatpush1.msra.mxu0 %v646
      %698 = vmatprep.subr.mxu0 0.0
      %699 = vmatpush1.msra.mxu0 %v647
      %700 = vmatprep.subr.mxu0 0.0
      %701 = vmatpush1.msra.mxu0 %v648
      %702 = vmatprep.subr.mxu0 0.0
      %703 = vmatpush1.msra.mxu0 %v649
      %704 = vmatprep.subr.mxu0 0.0
      %705 = vmatpush1.msra.mxu0 %v650
      %706 = vmatprep.subr.mxu0 0.0
      %707 = vmatpush1.msra.mxu0 %v651
      %708 = vmatprep.subr.mxu0 0.0
      %709 = vmatpush1.msra.mxu0 %v652
      %710 = vmatprep.subr.mxu0 0.0
      %711 = vmatpush1.msra.mxu0 %v653
      %712 = vmatprep.subr.mxu0 0.0
      %713 = vmatpush1.msra.mxu0 %v654
      %714 = vmatprep.subr.mxu0 0.0
      %715 = vmatpush1.msra.mxu0 %v655
      %716 = vmatprep.subr.mxu0 0.0
      %717 = vmatpush1.msra.mxu0 %v656
      %718 = vmatprep.subr.mxu0 0.0
      %719 = vmatpush1.msra.mxu0 %v657
      %720 = vmatprep.subr.mxu0 0.0
      %721 = vmatpush1.msra.mxu0 %v658
      %722 = vmatprep.subr.mxu0 0.0
      %723 = vmatpush1.msra.mxu0 %v659
      %724 = vmatprep.subr.mxu0 0.0
      %725 = vmatpush1.msra.mxu0 %v660
      %726 = vmatprep.subr.mxu0 0.0
      %727 = vmatpush1.msra.mxu0 %v661
      %728 = vmatprep.subr.mxu0 0.0
      %729 = vmatpush1.msra.mxu0 %v662
      %730 = vmatprep.mubr.f32.mxu0 %v664
      %731 = vmatmul.mubr.f32.gmra.mrb[0].mxu0 %v630
      %v732 = vpop.f32.mrb[0].mxu0
      %v733 = vadd.f32 0.0, %v732
      %v734 = vpop.f32.mrb[0].mxu0
      %735 = vdwg.mxu0
      %v736 = vld [vmem:[%s2] sm:$0xf]
      %v737 = vld [vmem:[%s3] sm:$0xf]
      %v738 = vmax.f32 %v630, 0.0
      %v739 = vlaneseq
      %v740 = vand.u32 %v739, 127
      %v741 = vadd.s32 %v740, 128
      %vm742 = vcmp.lt.s32.totalorder %v740, 0
      %v743 = vsub.s32 0, %v740
      %v744 = vsel %vm742, %v743, %v740
      %v745 = vshrl.u32 %v744, 4
      %v746 = vand.u32 %v744, 15
      %v747 = vsub.s32 0, %v746
      %v748 = vsel %vm742, %v747, %v746
      %vm749 = vcmp.lt.s32.totalorder %v741, 0
      %v750 = vsub.s32 0, %v741
      %v751 = vsel %vm749, %v750, %v741
      %v752 = vshrl.u32 %v751, 4
      %v753 = vand.u32 %v751, 15
      %v754 = vsub.s32 0, %v753
      %v755 = vsel %vm749, %v754, %v753
      %vm756 = vcmp.ne.s32.totalorder %v748, 0
      %vm757 = vcmp.ne.s32.totalorder %v755, 0
      %vm758 = vcmp.lt.s32.totalorder %v748, 0
      %vm759 = vcmp.lt.s32.totalorder %v755, 0
      %vm760 = vmand %vm758, %vm756
      %vm761 = vmand %vm759, %vm757
      %v762 = vadd.s32 %v748, 16
      %v763 = vadd.s32 %v755, 16
      %v764 = vsel %vm760, %v762, %v748
      %v765 = vsel %vm761, %v763, %v755
      %vm766 = vcmp.gt.s32.totalorder %v764, 0
      %vm767 = vcmp.gt.s32.totalorder %v765, 0
      %v769 = vcombine.high %v738, %v738
      %770 = vrot.lane.b32.xlu0 %v738, 1
      %v771 = vpop.permute.xlu0 %770
      %772 = vrot.lane.b32.xlu0 %v769, 1
      %v773 = vpop.permute.xlu0 %772
      %vm774 = vcmask 7168
      %v775 = vsel %vm774, %v771, %v773
      %v778 = vsel %vm774, 0.0, %v771
      %v779 = vsel %vm766, 1, 0
      %v780 = vsel %vm767, 1, 0
      %vm781 = vcmp.eq.s32.totalorder %v779, 1
      %vm782 = vcmp.eq.s32.totalorder %v780, 1
      %v783 = vsel %vm781, %v778, 0.0
      %v784 = vsel %vm782, %v775, 0.0
      %vm785 = vcmp.lt.s32.totalorder %v764, 15
      %vm786 = vcmp.lt.s32.totalorder %v765, 15
      %787 = vrot.lane.b32.xlu0 %v738, 127
      %v788 = vpop.permute.xlu0 %787
      %789 = vrot.lane.b32.xlu0 %v769, 127
      %v790 = vpop.permute.xlu0 %789
      %vm791 = vcmask 1039360
      %v792 = vsel %vm791, %v788, %v790
      %v795 = vsel %vm791, %v790, 0.0
      %v796 = vsel %vm785, 1, 0
      %v797 = vsel %vm786, 1, 0
      %vm798 = vcmp.eq.s32.totalorder %v796, 1
      %vm799 = vcmp.eq.s32.totalorder %v797, 1
      %v800 = vsel %vm798, %v792, 0.0
      %v801 = vsel %vm799, %v795, 0.0
      %803 = vset.pattern.permute.xlu0 4
      %804 = vperm.xlu0 %803, %v736
      %v805 = vpop.permute.xlu0 %804
      %v807 = vunpack.c.l.s4 839922192
      %v808 = vunpack.c.0.s8 %v807
      %v809 = vlaneseq
      %v810 = vshrl.u32 %v809, 7
      %v811 = vsub.s32 %v808, %v810
      %v812 = vrot.slane %v805, %v811
      %v814 = vmul.f32 %v738, %v812
      %816 = vset.pattern.permute.xlu0 0
      %817 = vperm.xlu0 %816, %v737
      %v818 = vpop.permute.xlu0 %817
      %v820 = vunpack.c.l.s4 839922192
      %v821 = vunpack.c.0.s8 %v820
      %v822 = vlaneseq
      %v823 = vshrl.u32 %v822, 7
      %v824 = vsub.s32 %v821, %v823
      %v825 = vrot.slane %v818, %v824
      %v827 = vadd.f32 %v814, %v825
      %830 = vrot.lane.b32.xlu0 %v783, 16
      %v831 = vpop.permute.xlu0 %830
      %832 = vrot.lane.b32.xlu0 %v784, 16
      %v833 = vpop.permute.xlu0 %832
      %vm834 = vcmask 130048
      %v835 = vsel %vm834, %v831, %v833
      %v838 = vsel %vm834, 0.0, %v831
      %839 = vset.pattern.permute.xlu0 0
      %840 = vperm.xlu0 %839, %v736
      %v841 = vpop.permute.xlu0 %840
      %v843 = vmul.f32 %v838, %v841
      %v844 = vmul.f32 %v835, %v841
      %v847 = vcombine.low %v843, %v844
      %v849 = vadd.f32 %v827, %v847
      %850 = vrot.lane.b32.xlu0 %v738, 16
      %v851 = vpop.permute.xlu0 %850
      %852 = vrot.lane.b32.xlu0 %v769, 16
      %v853 = vpop.permute.xlu0 %852
      %v854 = vsel %vm834, %v851, %v853
      %v857 = vsel %vm834, 0.0, %v851
      %858 = vset.pattern.permute.xlu0 1
      %859 = vperm.xlu0 %858, %v736
      %v860 = vpop.permute.xlu0 %859
      %v862 = vmul.f32 %v857, %v860
      %v863 = vmul.f32 %v854, %v860
      %v866 = vcombine.low %v862, %v863
      %v868 = vadd.f32 %v849, %v866
      %871 = vrot.lane.b32.xlu0 %v800, 16
      %v872 = vpop.permute.xlu0 %871
      %873 = vrot.lane.b32.xlu0 %v801, 16
      %v874 = vpop.permute.xlu0 %873
      %v875 = vsel %vm834, %v872, %v874
      %v878 = vsel %vm834, 0.0, %v872
      %879 = vset.pattern.permute.xlu0 2
      %880 = vperm.xlu0 %879, %v736
      %v881 = vpop.permute.xlu0 %880
      %v883 = vmul.f32 %v878, %v881
      %v884 = vmul.f32 %v875, %v881
      %v887 = vcombine.low %v883, %v884
      %v889 = vadd.f32 %v868, %v887
      %890 = vset.pattern.permute.xlu0 3
      %891 = vperm.xlu0 %890, %v736
      %v892 = vpop.permute.xlu0 %891
      %v894 = vmul.f32 %v783, %v892
      %v895 = vmul.f32 %v784, %v892
      %v898 = vcombine.low %v894, %v895
      %v900 = vadd.f32 %v889, %v898
      %901 = vset.pattern.permute.xlu0 5
      %902 = vperm.xlu0 %901, %v736
      %v903 = vpop.permute.xlu0 %902
      %v905 = vmul.f32 %v800, %v903
      %v906 = vmul.f32 %v801, %v903
      %v909 = vcombine.low %v905, %v906
      %v911 = vadd.f32 %v900, %v909
      %912 = vrot.lane.b32.xlu0 %v783, 112
      %v913 = vpop.permute.xlu0 %912
      %914 = vrot.lane.b32.xlu0 %v784, 112
      %v915 = vpop.permute.xlu0 %914
      %vm916 = vcmask 916480
      %v917 = vsel %vm916, %v913, %v915
      %v920 = vsel %vm916, %v915, 0.0
      %921 = vset.pattern.permute.xlu0 6
      %922 = vperm.xlu0 %921, %v736
      %v923 = vpop.permute.xlu0 %922
      %v925 = vmul.f32 %v917, %v923
      %v926 = vmul.f32 %v920, %v923
      %v929 = vcombine.low %v925, %v926
      %v931 = vadd.f32 %v911, %v929
      %932 = vrot.lane.b32.xlu0 %v738, 112
      %v933 = vpop.permute.xlu0 %932
      %934 = vrot.lane.b32.xlu0 %v769, 112
      %v935 = vpop.permute.xlu0 %934
      %v936 = vsel %vm916, %v933, %v935
      %v939 = vsel %vm916, %v935, 0.0
      %940 = vset.pattern.permute.xlu0 7
      %941 = vperm.xlu0 %940, %v736
      %v942 = vpop.permute.xlu0 %941
      %v944 = vmul.f32 %v936, %v942
      %v945 = vmul.f32 %v939, %v942
      %v948 = vcombine.low %v944, %v945
      %v950 = vadd.f32 %v931, %v948
      %951 = vrot.lane.b32.xlu0 %v800, 112
      %v952 = vpop.permute.xlu0 %951
      %953 = vrot.lane.b32.xlu0 %v801, 112
      %v954 = vpop.permute.xlu0 %953
      %v955 = vsel %vm916, %v952, %v954
      %v958 = vsel %vm916, %v954, 0.0
      %959 = vset.pattern.permute.xlu0 8
      %960 = vperm.xlu0 %959, %v736
      %v961 = vpop.permute.xlu0 %960
      %v963 = vmul.f32 %v955, %v961
      %v964 = vmul.f32 %v958, %v961
      %v967 = vcombine.low %v963, %v964
      %v969 = vadd.f32 %v950, %v967
      %v970 = vld [vmem:[%s4] sm:$0xff]
      %v971 = vld [vmem:[%s5] sm:$0xff]
      %973 = vset.pattern.permute.xlu0 0
      %974 = vperm.xlu0 %973, %v971
      %v975 = vpop.permute.xlu0 %974
      %v978 = vcombine.high %v969, %v969
      %vm979 = vcmask 31744
      %v981 = vsel %vm979, %v970, 0
      %vm983 = vcmask 1043456
      %v984 = vsel %vm983, %v969, 0
      %v986 = vsel %vm983, %v978, 0
      %988 = vmatprep.subr.mxu0 %v986
      %989 = vmatpush1.msra.mxu0 %v984
      %990 = vmatprep.subr.mxu0 0.0
      %991 = vmatpush1.msra.mxu0 0.0
      %992 = vmatprep.subr.mxu0 0.0
      %993 = vmatpush1.msra.mxu0 0.0
      %994 = vmatprep.subr.mxu0 0.0
      %995 = vmatpush1.msra.mxu0 0.0
      %996 = vmatprep.subr.mxu0 0.0
      %997 = vmatpush1.msra.mxu0 0.0
      %998 = vmatprep.subr.mxu0 0.0
      %999 = vmatpush1.msra.mxu0 0.0
      %1000 = vmatprep.subr.mxu0 0.0
      %1001 = vmatpush1.msra.mxu0 0.0
      %1002 = vmatprep.subr.mxu0 0.0
      %1003 = vmatpush1.msra.mxu0 0.0
      %1004 = vmatprep.subr.mxu0 0.0
      %1005 = vmatpush1.msra.mxu0 0.0
      %1006 = vmatprep.subr.mxu0 0.0
      %1007 = vmatpush1.msra.mxu0 0.0
      %1008 = vmatprep.subr.mxu0 0.0
      %1009 = vmatpush1.msra.mxu0 0.0
      %1010 = vmatprep.subr.mxu0 0.0
      %1011 = vmatpush1.msra.mxu0 0.0
      %1012 = vmatprep.subr.mxu0 0.0
      %1013 = vmatpush1.msra.mxu0 0.0
      %1014 = vmatprep.subr.mxu0 0.0
      %1015 = vmatpush1.msra.mxu0 0.0
      %1016 = vmatprep.subr.mxu0 0.0
      %1017 = vmatpush1.msra.mxu0 0.0
      %1018 = vmatprep.subr.mxu0 0.0
      %1019 = vmatpush1.msra.mxu0 0.0
      %1020 = vmatprep.subr.mxu0 0.0
      %1021 = vmatpush1.msra.mxu0 0.0
      %1022 = vmatprep.subr.mxu0 0.0
      %1023 = vmatpush1.msra.mxu0 0.0
      %1024 = vmatprep.subr.mxu0 0.0
      %1025 = vmatpush1.msra.mxu0 0.0
      %1026 = vmatprep.subr.mxu0 0.0
      %1027 = vmatpush1.msra.mxu0 0.0
      %1028 = vmatprep.subr.mxu0 0.0
      %1029 = vmatpush1.msra.mxu0 0.0
      %1030 = vmatprep.subr.mxu0 0.0
      %1031 = vmatpush1.msra.mxu0 0.0
      %1032 = vmatprep.subr.mxu0 0.0
      %1033 = vmatpush1.msra.mxu0 0.0
      %1034 = vmatprep.subr.mxu0 0.0
      %1035 = vmatpush1.msra.mxu0 0.0
      %1036 = vmatprep.subr.mxu0 0.0
      %1037 = vmatpush1.msra.mxu0 0.0
      %1038 = vmatprep.subr.mxu0 0.0
      %1039 = vmatpush1.msra.mxu0 0.0
      %1040 = vmatprep.subr.mxu0 0.0
      %1041 = vmatpush1.msra.mxu0 0.0
      %1042 = vmatprep.subr.mxu0 0.0
      %1043 = vmatpush1.msra.mxu0 0.0
      %1044 = vmatprep.subr.mxu0 0.0
      %1045 = vmatpush1.msra.mxu0 0.0
      %1046 = vmatprep.subr.mxu0 0.0
      %1047 = vmatpush1.msra.mxu0 0.0
      %1048 = vmatprep.subr.mxu0 0.0
      %1049 = vmatpush1.msra.mxu0 0.0
      %1050 = vmatprep.subr.mxu0 0.0
      %1051 = vmatpush1.msra.mxu0 0.0
      %1052 = vmatprep.mubr.f32.mxu0 0.0
      %1053 = vmatmul.mubr.f32.gmra.mrb[0].mxu0 %v981
      %v1054 = vpop.f32.mrb[0].mxu0
      %v1055 = vadd.f32 %v975, %v1054
      %v1056 = vpop.f32.mrb[0].mxu0
      %v1057 = vadd.f32 %v975, %v1056
      %1058 = vdwg.mxu0
      %v1059 = vld [vmem:[%s6] sm:$0xff]
      %v1060 = vld [vmem:[%s7] sm:$0xff]
      %v1061 = vmax.f32 %v1055, 0.0
      %v1062 = vmax.f32 %v1057, 0.0
      %1065 = vrot.lane.b32.xlu0 %v1061, 1
      %v1066 = vpop.permute.xlu0 %1065
      %1067 = vrot.lane.b32.xlu0 %v1062, 1
      %v1068 = vpop.permute.xlu0 %1067
      %v1069 = vsel %vm774, %v1066, %v1068
      %v1072 = vsel %vm774, 0.0, %v1066
      %v1073 = vsel %vm781, %v1072, 0.0
      %v1074 = vsel %vm782, %v1069, 0.0
      %1075 = vrot.lane.b32.xlu0 %v1061, 127
      %v1076 = vpop.permute.xlu0 %1075
      %1077 = vrot.lane.b32.xlu0 %v1062, 127
      %v1078 = vpop.permute.xlu0 %1077
      %v1079 = vsel %vm791, %v1076, %v1078
      %v1082 = vsel %vm791, %v1078, 0.0
      %v1083 = vsel %vm798, %v1079, 0.0
      %v1084 = vsel %vm799, %v1082, 0.0
      %1086 = vset.pattern.permute.xlu0 4
      %1087 = vperm.xlu0 %1086, %v1059
      %v1088 = vpop.permute.xlu0 %1087
      %v1090 = vmul.f32 %v1061, %v1088
      %v1091 = vmul.f32 %v1062, %v1088
      %1093 = vset.pattern.permute.xlu0 0
      %1094 = vperm.xlu0 %1093, %v1060
      %v1095 = vpop.permute.xlu0 %1094
      %v1097 = vadd.f32 %v1090, %v1095
      %v1098 = vadd.f32 %v1091, %v1095
      %1101 = vrot.lane.b32.xlu0 %v1073, 16
      %v1102 = vpop.permute.xlu0 %1101
      %1103 = vrot.lane.b32.xlu0 %v1074, 16
      %v1104 = vpop.permute.xlu0 %1103
      %v1105 = vsel %vm834, %v1102, %v1104
      %v1108 = vsel %vm834, 0.0, %v1102
      %1109 = vset.pattern.permute.xlu0 0
      %1110 = vperm.xlu0 %1109, %v1059
      %v1111 = vpop.permute.xlu0 %1110
      %v1113 = vmul.f32 %v1108, %v1111
      %v1114 = vmul.f32 %v1105, %v1111
      %v1115 = vadd.f32 %v1097, %v1113
      %v1116 = vadd.f32 %v1098, %v1114
      %1117 = vrot.lane.b32.xlu0 %v1061, 16
      %v1118 = vpop.permute.xlu0 %1117
      %1119 = vrot.lane.b32.xlu0 %v1062, 16
      %v1120 = vpop.permute.xlu0 %1119
      %v1121 = vsel %vm834, %v1118, %v1120
      %v1124 = vsel %vm834, 0.0, %v1118
      %1125 = vset.pattern.permute.xlu0 1
      %1126 = vperm.xlu0 %1125, %v1059
      %v1127 = vpop.permute.xlu0 %1126
      %v1129 = vmul.f32 %v1124, %v1127
      %v1130 = vmul.f32 %v1121, %v1127
      %v1131 = vadd.f32 %v1115, %v1129
      %v1132 = vadd.f32 %v1116, %v1130
      %1135 = vrot.lane.b32.xlu0 %v1083, 16
      %v1136 = vpop.permute.xlu0 %1135
      %1137 = vrot.lane.b32.xlu0 %v1084, 16
      %v1138 = vpop.permute.xlu0 %1137
      %v1139 = vsel %vm834, %v1136, %v1138
      %v1142 = vsel %vm834, 0.0, %v1136
      %1143 = vset.pattern.permute.xlu0 2
      %1144 = vperm.xlu0 %1143, %v1059
      %v1145 = vpop.permute.xlu0 %1144
      %v1147 = vmul.f32 %v1142, %v1145
      %v1148 = vmul.f32 %v1139, %v1145
      %v1149 = vadd.f32 %v1131, %v1147
      %v1150 = vadd.f32 %v1132, %v1148
      %1151 = vset.pattern.permute.xlu0 3
      %1152 = vperm.xlu0 %1151, %v1059
      %v1153 = vpop.permute.xlu0 %1152
      %v1155 = vmul.f32 %v1073, %v1153
      %v1156 = vmul.f32 %v1074, %v1153
      %v1157 = vadd.f32 %v1149, %v1155
      %v1158 = vadd.f32 %v1150, %v1156
      %1159 = vset.pattern.permute.xlu0 5
      %1160 = vperm.xlu0 %1159, %v1059
      %v1161 = vpop.permute.xlu0 %1160
      %v1163 = vmul.f32 %v1083, %v1161
      %v1164 = vmul.f32 %v1084, %v1161
      %v1165 = vadd.f32 %v1157, %v1163
      %v1166 = vadd.f32 %v1158, %v1164
      %1167 = vrot.lane.b32.xlu0 %v1073, 112
      %v1168 = vpop.permute.xlu0 %1167
      %1169 = vrot.lane.b32.xlu0 %v1074, 112
      %v1170 = vpop.permute.xlu0 %1169
      %v1171 = vsel %vm916, %v1168, %v1170
      %v1174 = vsel %vm916, %v1170, 0.0
      %1175 = vset.pattern.permute.xlu0 6
      %1176 = vperm.xlu0 %1175, %v1059
      %v1177 = vpop.permute.xlu0 %1176
      %v1179 = vmul.f32 %v1171, %v1177
      %v1180 = vmul.f32 %v1174, %v1177
      %v1181 = vadd.f32 %v1165, %v1179
      %v1182 = vadd.f32 %v1166, %v1180
      %1183 = vrot.lane.b32.xlu0 %v1061, 112
      %v1184 = vpop.permute.xlu0 %1183
      %1185 = vrot.lane.b32.xlu0 %v1062, 112
      %v1186 = vpop.permute.xlu0 %1185
      %v1187 = vsel %vm916, %v1184, %v1186
      %v1190 = vsel %vm916, %v1186, 0.0
      %1191 = vset.pattern.permute.xlu0 7
      %1192 = vperm.xlu0 %1191, %v1059
      %v1193 = vpop.permute.xlu0 %1192
      %v1195 = vmul.f32 %v1187, %v1193
      %v1196 = vmul.f32 %v1190, %v1193
      %v1197 = vadd.f32 %v1181, %v1195
      %v1198 = vadd.f32 %v1182, %v1196
      %1199 = vrot.lane.b32.xlu0 %v1083, 112
      %v1200 = vpop.permute.xlu0 %1199
      %1201 = vrot.lane.b32.xlu0 %v1084, 112
      %v1202 = vpop.permute.xlu0 %1201
      %v1203 = vsel %vm916, %v1200, %v1202
      %v1206 = vsel %vm916, %v1202, 0.0
      %1207 = vset.pattern.permute.xlu0 8
      %1208 = vperm.xlu0 %1207, %v1059
      %v1209 = vpop.permute.xlu0 %1208
      %v1211 = vmul.f32 %v1203, %v1209
      %v1212 = vmul.f32 %v1206, %v1209
      %v1213 = vadd.f32 %v1197, %v1211
      %v1214 = vadd.f32 %v1198, %v1212
      %v1215 = vld [vmem:[%s8] sm:$0xff]
      %v1216 = vld [vmem:[%s9] sm:$0xff]
      %1218 = vset.pattern.permute.xlu0 0
      %1219 = vperm.xlu0 %1218, %v1216
      %v1220 = vpop.permute.xlu0 %1219
      %vm1222 = vcmask 64512
      %v1224 = vsel %vm1222, %v1215, 0
      %1226 = vmatprep.subr.mxu0 %v1214
      %1227 = vmatpush1.msra.mxu0 %v1213
      %1228 = vmatprep.subr.mxu0 0.0
      %1229 = vmatpush1.msra.mxu0 0.0
      %1230 = vmatprep.subr.mxu0 0.0
      %1231 = vmatpush1.msra.mxu0 0.0
      %1232 = vmatprep.subr.mxu0 0.0
      %1233 = vmatpush1.msra.mxu0 0.0
      %1234 = vmatprep.subr.mxu0 0.0
      %1235 = vmatpush1.msra.mxu0 0.0
      %1236 = vmatprep.subr.mxu0 0.0
      %1237 = vmatpush1.msra.mxu0 0.0
      %1238 = vmatprep.subr.mxu0 0.0
      %1239 = vmatpush1.msra.mxu0 0.0
      %1240 = vmatprep.subr.mxu0 0.0
      %1241 = vmatpush1.msra.mxu0 0.0
      %1242 = vmatprep.subr.mxu0 0.0
      %1243 = vmatpush1.msra.mxu0 0.0
      %1244 = vmatprep.subr.mxu0 0.0
      %1245 = vmatpush1.msra.mxu0 0.0
      %1246 = vmatprep.subr.mxu0 0.0
      %1247 = vmatpush1.msra.mxu0 0.0
      %1248 = vmatprep.subr.mxu0 0.0
      %1249 = vmatpush1.msra.mxu0 0.0
      %1250 = vmatprep.subr.mxu0 0.0
      %1251 = vmatpush1.msra.mxu0 0.0
      %1252 = vmatprep.subr.mxu0 0.0
      %1253 = vmatpush1.msra.mxu0 0.0
      %1254 = vmatprep.subr.mxu0 0.0
      %1255 = vmatpush1.msra.mxu0 0.0
      %1256 = vmatprep.subr.mxu0 0.0
      %1257 = vmatpush1.msra.mxu0 0.0
      %1258 = vmatprep.subr.mxu0 0.0
      %1259 = vmatpush1.msra.mxu0 0.0
      %1260 = vmatprep.subr.mxu0 0.0
      %1261 = vmatpush1.msra.mxu0 0.0
      %1262 = vmatprep.subr.mxu0 0.0
      %1263 = vmatpush1.msra.mxu0 0.0
      %1264 = vmatprep.subr.mxu0 0.0
      %1265 = vmatpush1.msra.mxu0 0.0
      %1266 = vmatprep.subr.mxu0 0.0
      %1267 = vmatpush1.msra.mxu0 0.0
      %1268 = vmatprep.subr.mxu0 0.0
      %1269 = vmatpush1.msra.mxu0 0.0
      %1270 = vmatprep.subr.mxu0 0.0
      %1271 = vmatpush1.msra.mxu0 0.0
      %1272 = vmatprep.subr.mxu0 0.0
      %1273 = vmatpush1.msra.mxu0 0.0
      %1274 = vmatprep.subr.mxu0 0.0
      %1275 = vmatpush1.msra.mxu0 0.0
      %1276 = vmatprep.subr.mxu0 0.0
      %1277 = vmatpush1.msra.mxu0 0.0
      %1278 = vmatprep.subr.mxu0 0.0
      %1279 = vmatpush1.msra.mxu0 0.0
      %1280 = vmatprep.subr.mxu0 0.0
      %1281 = vmatpush1.msra.mxu0 0.0
      %1282 = vmatprep.subr.mxu0 0.0
      %1283 = vmatpush1.msra.mxu0 0.0
      %1284 = vmatprep.subr.mxu0 0.0
      %1285 = vmatpush1.msra.mxu0 0.0
      %1286 = vmatprep.subr.mxu0 0.0
      %1287 = vmatpush1.msra.mxu0 0.0
      %1288 = vmatprep.subr.mxu0 0.0
      %1289 = vmatpush1.msra.mxu0 0.0
      %1290 = vmatprep.mubr.f32.mxu0 0.0
      %1291 = vmatmul.mubr.f32.gmra.mrb[0].mxu0 %v1224
      %v1292 = vpop.f32.mrb[0].mxu0
      %v1293 = vadd.f32 %v1220, %v1292
      %v1294 = vpop.f32.mrb[0].mxu0
      %v1295 = vadd.f32 %v1220, %v1294
      %1296 = vdwg.mxu0
      %1299 = vrot.lane.b32.xlu0 %v1293, 1
      %v1300 = vpop.permute.xlu0 %1299
      %1301 = vrot.lane.b32.xlu0 %v1295, 1
      %v1302 = vpop.permute.xlu0 %1301
      %v1303 = vsel %vm774, %v1300, %v1302
      %v1306 = vsel %vm774, -inf, %v1300
      %v1307 = vsel %vm781, %v1306, -inf
      %v1308 = vsel %vm782, %v1303, -inf
      %1309 = vrot.lane.b32.xlu0 %v1293, 127
      %v1310 = vpop.permute.xlu0 %1309
      %1311 = vrot.lane.b32.xlu0 %v1295, 127
      %v1312 = vpop.permute.xlu0 %1311
      %v1313 = vsel %vm791, %v1310, %v1312
      %v1316 = vsel %vm791, %v1312, -inf
      %v1317 = vsel %vm798, %v1313, -inf
      %v1318 = vsel %vm799, %v1316, -inf
      %v1319 = vmax.f32 %v1307, %v1317
      %v1320 = vmax.f32 %v1308, %v1318
      %v1321 = vmax.f32 %v1319, %v1293
      %v1322 = vmax.f32 %v1320, %v1295
      %1325 = vrot.lane.b32.xlu0 %v1321, 16
      %v1326 = vpop.permute.xlu0 %1325
      %1327 = vrot.lane.b32.xlu0 %v1322, 16
      %v1328 = vpop.permute.xlu0 %1327
      %v1329 = vsel %vm834, %v1326, %v1328
      %v1332 = vsel %vm834, -inf, %v1326
      %1333 = vrot.lane.b32.xlu0 %v1321, 112
      %v1334 = vpop.permute.xlu0 %1333
      %1335 = vrot.lane.b32.xlu0 %v1322, 112
      %v1336 = vpop.permute.xlu0 %1335
      %v1337 = vsel %vm916, %v1334, %v1336
      %v1340 = vsel %vm916, %v1336, -inf
      %v1341 = vmax.f32 %v1332, %v1337
      %v1342 = vmax.f32 %v1329, %v1340
      %v1343 = vmax.f32 %v1341, %v1321
      %v1344 = vmax.f32 %v1342, %v1322
      %v1345 = vld [vmem:[%s10] sm:$0xff]
      %v1346 = vld [vmem:[%s11] sm:$0xff]
      %1348 = vset.pattern.permute.xlu0 0
      %1349 = vperm.xlu0 %1348, %v1346
      %v1350 = vpop.permute.xlu0 %1349
      %v1353 = vsel %vm979, %v1345, 0
      %v1356 = vsel %vm983, %v733, 0
      %1358 = vmatprep.subr.mxu0 0.0
      %1359 = vmatpush1.msra.mxu0 %v1356
      %1360 = vmatprep.subr.mxu0 0.0
      %1361 = vmatpush1.msra.mxu0 0.0
      %1362 = vmatprep.subr.mxu0 0.0
      %1363 = vmatpush1.msra.mxu0 0.0
      %1364 = vmatprep.subr.mxu0 0.0
      %1365 = vmatpush1.msra.mxu0 0.0
      %1366 = vmatprep.subr.mxu0 0.0
      %1367 = vmatpush1.msra.mxu0 0.0
      %1368 = vmatprep.subr.mxu0 0.0
      %1369 = vmatpush1.msra.mxu0 0.0
      %1370 = vmatprep.subr.mxu0 0.0
      %1371 = vmatpush1.msra.mxu0 0.0
      %1372 = vmatprep.subr.mxu0 0.0
      %1373 = vmatpush1.msra.mxu0 0.0
      %1374 = vmatprep.subr.mxu0 0.0
      %1375 = vmatpush1.msra.mxu0 0.0
      %1376 = vmatprep.subr.mxu0 0.0
      %1377 = vmatpush1.msra.mxu0 0.0
      %1378 = vmatprep.subr.mxu0 0.0
      %1379 = vmatpush1.msra.mxu0 0.0
      %1380 = vmatprep.subr.mxu0 0.0
      %1381 = vmatpush1.msra.mxu0 0.0
      %1382 = vmatprep.subr.mxu0 0.0
      %1383 = vmatpush1.msra.mxu0 0.0
      %1384 = vmatprep.subr.mxu0 0.0
      %1385 = vmatpush1.msra.mxu0 0.0
      %1386 = vmatprep.subr.mxu0 0.0
      %1387 = vmatpush1.msra.mxu0 0.0
      %1388 = vmatprep.subr.mxu0 0.0
      %1389 = vmatpush1.msra.mxu0 0.0
      %1390 = vmatprep.subr.mxu0 0.0
      %1391 = vmatpush1.msra.mxu0 0.0
      %1392 = vmatprep.subr.mxu0 0.0
      %1393 = vmatpush1.msra.mxu0 0.0
      %1394 = vmatprep.subr.mxu0 0.0
      %1395 = vmatpush1.msra.mxu0 0.0
      %1396 = vmatprep.subr.mxu0 0.0
      %1397 = vmatpush1.msra.mxu0 0.0
      %1398 = vmatprep.subr.mxu0 0.0
      %1399 = vmatpush1.msra.mxu0 0.0
      %1400 = vmatprep.subr.mxu0 0.0
      %1401 = vmatpush1.msra.mxu0 0.0
      %1402 = vmatprep.subr.mxu0 0.0
      %1403 = vmatpush1.msra.mxu0 0.0
      %1404 = vmatprep.subr.mxu0 0.0
      %1405 = vmatpush1.msra.mxu0 0.0
      %1406 = vmatprep.subr.mxu0 0.0
      %1407 = vmatpush1.msra.mxu0 0.0
      %1408 = vmatprep.subr.mxu0 0.0
      %1409 = vmatpush1.msra.mxu0 0.0
      %1410 = vmatprep.subr.mxu0 0.0
      %1411 = vmatpush1.msra.mxu0 0.0
      %1412 = vmatprep.subr.mxu0 0.0
      %1413 = vmatpush1.msra.mxu0 0.0
      %1414 = vmatprep.subr.mxu0 0.0
      %1415 = vmatpush1.msra.mxu0 0.0
      %1416 = vmatprep.subr.mxu0 0.0
      %1417 = vmatpush1.msra.mxu0 0.0
      %1418 = vmatprep.subr.mxu0 0.0
      %1419 = vmatpush1.msra.mxu0 0.0
      %1420 = vmatprep.subr.mxu0 0.0
      %1421 = vmatpush1.msra.mxu0 0.0
      %1422 = vmatprep.mubr.f32.mxu0 0.0
      %1423 = vmatmul.mubr.f32.gmra.mrb[0].mxu0 %v1353
      %v1424 = vpop.f32.mrb[0].mxu0
      %v1425 = vadd.f32 %v1350, %v1424
      %v1426 = vpop.f32.mrb[0].mxu0
      %1427 = vdwg.mxu0
      %1428 = vmatprep.subr.mxu0 0.0
      %1429 = vmatpush1.msra.mxu0 %v631
      %1430 = vmatprep.subr.mxu0 0.0
      %1431 = vmatpush1.msra.mxu0 %v632
      %1432 = vmatprep.subr.mxu0 0.0
      %1433 = vmatpush1.msra.mxu0 %v633
      %1434 = vmatprep.subr.mxu0 0.0
      %1435 = vmatpush1.msra.mxu0 %v634
      %1436 = vmatprep.subr.mxu0 0.0
      %1437 = vmatpush1.msra.mxu0 %v635
      %1438 = vmatprep.subr.mxu0 0.0
      %1439 = vmatpush1.msra.mxu0 %v636
      %1440 = vmatprep.subr.mxu0 0.0
      %1441 = vmatpush1.msra.mxu0 %v637
      %1442 = vmatprep.subr.mxu0 0.0
      %1443 = vmatpush1.msra.mxu0 %v638
      %1444 = vmatprep.subr.mxu0 0.0
      %1445 = vmatpush1.msra.mxu0 %v639
      %1446 = vmatprep.subr.mxu0 0.0
      %1447 = vmatpush1.msra.mxu0 %v640
      %1448 = vmatprep.subr.mxu0 0.0
      %1449 = vmatpush1.msra.mxu0 %v641
      %1450 = vmatprep.subr.mxu0 0.0
      %1451 = vmatpush1.msra.mxu0 %v642
      %1452 = vmatprep.subr.mxu0 0.0
      %1453 = vmatpush1.msra.mxu0 %v643
      %1454 = vmatprep.subr.mxu0 0.0
      %1455 = vmatpush1.msra.mxu0 %v644
      %1456 = vmatprep.subr.mxu0 0.0
      %1457 = vmatpush1.msra.mxu0 %v645
      %1458 = vmatprep.subr.mxu0 0.0
      %1459 = vmatpush1.msra.mxu0 %v646
      %1460 = vmatprep.subr.mxu0 0.0
      %1461 = vmatpush1.msra.mxu0 %v647
      %1462 = vmatprep.subr.mxu0 0.0
      %1463 = vmatpush1.msra.mxu0 %v648
      %1464 = vmatprep.subr.mxu0 0.0
      %1465 = vmatpush1.msra.mxu0 %v649
      %1466 = vmatprep.subr.mxu0 0.0
      %1467 = vmatpush1.msra.mxu0 %v650
      %1468 = vmatprep.subr.mxu0 0.0
      %1469 = vmatpush1.msra.mxu0 %v651
      %1470 = vmatprep.subr.mxu0 0.0
      %1471 = vmatpush1.msra.mxu0 %v652
      %1472 = vmatprep.subr.mxu0 0.0
      %1473 = vmatpush1.msra.mxu0 %v653
      %1474 = vmatprep.subr.mxu0 0.0
      %1475 = vmatpush1.msra.mxu0 %v654
      %1476 = vmatprep.subr.mxu0 0.0
      %1477 = vmatpush1.msra.mxu0 %v655
      %1478 = vmatprep.subr.mxu0 0.0
      %1479 = vmatpush1.msra.mxu0 %v656
      %1480 = vmatprep.subr.mxu0 0.0
      %1481 = vmatpush1.msra.mxu0 %v657
      %1482 = vmatprep.subr.mxu0 0.0
      %1483 = vmatpush1.msra.mxu0 %v658
      %1484 = vmatprep.subr.mxu0 0.0
      %1485 = vmatpush1.msra.mxu0 %v659
      %1486 = vmatprep.subr.mxu0 0.0
      %1487 = vmatpush1.msra.mxu0 %v660
      %1488 = vmatprep.subr.mxu0 0.0
      %1489 = vmatpush1.msra.mxu0 %v661
      %1490 = vmatprep.subr.mxu0 0.0
      %1491 = vmatpush1.msra.mxu0 %v662
      %1492 = vmatprep.mubr.f32.mxu0 %v1344
      %1493 = vmatmul.mubr.f32.gmra.mrb[0].mxu0 %v1343
      %v1494 = vpop.f32.mrb[0].mxu0
      %v1495 = vadd.f32 %v1425, %v1494
      %v1496 = vpop.f32.mrb[0].mxu0
      %1497 = vdwg.mxu0
      %v1498 = vld [vmem:[%s12] sm:$0xff]
      %v1499 = vld [vmem:[%s13] sm:$0xff]
      %vm1500 = vcmp.lt.s32.totalorder %v740, 0
      %v1501 = vsub.s32 0, %v740
      %v1502 = vsel %vm1500, %v1501, %v740
      %v1503 = vshrl.u32 %v1502, 3
      %v1504 = vand.u32 %v1502, 7
      %v1505 = vsub.s32 0, %v1504
      %v1506 = vsel %vm1500, %v1505, %v1504
      %vm1507 = vcmp.ne.s32.totalorder %v1506, 0
      %vm1508 = vcmp.lt.s32.totalorder %v1506, 0
      %vm1509 = vmand %vm1508, %vm1507
      %v1510 = vadd.s32 %v1506, 8
      %v1511 = vsel %vm1509, %v1510, %v1506
      %vm1512 = vcmp.gt.s32.totalorder %v1511, 0
      %1514 = vrot.lane.b32.xlu0 %v1495, 1
      %v1515 = vpop.permute.xlu0 %1514
      %v1517 = vsel %vm774, 0.0, %v1515
      %v1518 = vsel %vm1512, 1, 0
      %vm1519 = vcmp.eq.s32.totalorder %v1518, 1
      %v1520 = vsel %vm1519, %v1517, 0.0
      %vm1521 = vcmp.lt.s32.totalorder %v1511, 7
      %1522 = vrot.lane.b32.xlu0 %v1495, 127
      %v1523 = vpop.permute.xlu0 %1522
      %vm1525 = vcmask 515072
      %v1526 = vsel %vm1525, %v1523, 0.0
      %v1527 = vsel %vm1521, 1, 0
      %vm1528 = vcmp.eq.s32.totalorder %v1527, 1
      %v1529 = vsel %vm1528, %v1526, 0.0
      %1531 = vset.pattern.permute.xlu0 4
      %1532 = vperm.xlu0 %1531, %v1498
      %v1533 = vpop.permute.xlu0 %1532
      %v1535 = vmul.f32 %v1495, %v1533
      %1537 = vset.pattern.permute.xlu0 0
      %1538 = vperm.xlu0 %1537, %v1499
      %v1539 = vpop.permute.xlu0 %1538
      %v1541 = vadd.f32 %v1535, %v1539
      %1543 = vrot.lane.b32.xlu0 %v1520, 8
      %v1544 = vpop.permute.xlu0 %1543
      %v1546 = vsel %vm1222, 0.0, %v1544
      %1547 = vset.pattern.permute.xlu0 0
      %1548 = vperm.xlu0 %1547, %v1498
      %v1549 = vpop.permute.xlu0 %1548
      %v1551 = vmul.f32 %v1546, %v1549
      %v1552 = vadd.f32 %v1541, %v1551
      %1553 = vrot.lane.b32.xlu0 %v1495, 8
      %v1554 = vpop.permute.xlu0 %1553
      %v1556 = vsel %vm1222, 0.0, %v1554
      %1557 = vset.pattern.permute.xlu0 1
      %1558 = vperm.xlu0 %1557, %v1498
      %v1559 = vpop.permute.xlu0 %1558
      %v1561 = vmul.f32 %v1556, %v1559
      %v1562 = vadd.f32 %v1552, %v1561
      %1564 = vrot.lane.b32.xlu0 %v1529, 8
      %v1565 = vpop.permute.xlu0 %1564
      %v1567 = vsel %vm1222, 0.0, %v1565
      %1568 = vset.pattern.permute.xlu0 2
      %1569 = vperm.xlu0 %1568, %v1498
      %v1570 = vpop.permute.xlu0 %1569
      %v1572 = vmul.f32 %v1567, %v1570
      %v1573 = vadd.f32 %v1562, %v1572
      %1574 = vset.pattern.permute.xlu0 3
      %1575 = vperm.xlu0 %1574, %v1498
      %v1576 = vpop.permute.xlu0 %1575
      %v1578 = vmul.f32 %v1520, %v1576
      %v1579 = vadd.f32 %v1573, %v1578
      %1580 = vset.pattern.permute.xlu0 5
      %1581 = vperm.xlu0 %1580, %v1498
      %v1582 = vpop.permute.xlu0 %1581
      %v1584 = vmul.f32 %v1529, %v1582
      %v1585 = vadd.f32 %v1579, %v1584
      %1586 = vrot.lane.b32.xlu0 %v1520, 120
      %v1587 = vpop.permute.xlu0 %1586
      %vm1589 = vcmask 457728
      %v1590 = vsel %vm1589, %v1587, 0.0
      %1591 = vset.pattern.permute.xlu0 6
      %1592 = vperm.xlu0 %1591, %v1498
      %v1593 = vpop.permute.xlu0 %1592
      %v1595 = vmul.f32 %v1590, %v1593
      %v1596 = vadd.f32 %v1585, %v1595
      %1597 = vrot.lane.b32.xlu0 %v1495, 120
      %v1598 = vpop.permute.xlu0 %1597
      %v1600 = vsel %vm1589, %v1598, 0.0
      %1601 = vset.pattern.permute.xlu0 7
      %1602 = vperm.xlu0 %1601, %v1498
      %v1603 = vpop.permute.xlu0 %1602
      %v1605 = vmul.f32 %v1600, %v1603
      %v1606 = vadd.f32 %v1596, %v1605
      %1607 = vrot.lane.b32.xlu0 %v1529, 120
      %v1608 = vpop.permute.xlu0 %1607
      %v1610 = vsel %vm1589, %v1608, 0.0
      %1611 = vset.pattern.permute.xlu0 8
      %1612 = vperm.xlu0 %1611, %v1498
      %v1613 = vpop.permute.xlu0 %1612
      %v1615 = vmul.f32 %v1610, %v1613
      %v1616 = vadd.f32 %v1606, %v1615
      %v1617 = vld [vmem:[%s14] sm:$0xff]
      %v1618 = vld [vmem:[%s14 + $0x8] sm:$0xff]
      %v1619 = vld [vmem:[%s15] sm:$0xff]
      %v1620 = vld [vmem:[%s15 + $0x8] sm:$0xff]
      %1622 = vset.pattern.permute.xlu0 0
      %1623 = vperm.xlu0 %1622, %v1619
      %v1624 = vpop.permute.xlu0 %1623
      %1627 = vset.pattern.permute.xlu0 0
      %1628 = vperm.xlu0 %1627, %v1620
      %v1629 = vpop.permute.xlu0 %1628
      %v1632 = vsel %vm1222, %v1617, 0
      %v1635 = vsel %vm1222, %v1618, 0
      %1637 = vmatprep.subr.mxu0 0.0
      %1638 = vmatpush1.msra.mxu0 %v1616
      %1639 = vmatprep.subr.mxu0 0.0
      %1640 = vmatpush1.msra.mxu0 0.0
      %1641 = vmatprep.subr.mxu0 0.0
      %1642 = vmatpush1.msra.mxu0 0.0
      %1643 = vmatprep.subr.mxu0 0.0
      %1644 = vmatpush1.msra.mxu0 0.0
      %1645 = vmatprep.subr.mxu0 0.0
      %1646 = vmatpush1.msra.mxu0 0.0
      %1647 = vmatprep.subr.mxu0 0.0
      %1648 = vmatpush1.msra.mxu0 0.0
      %1649 = vmatprep.subr.mxu0 0.0
      %1650 = vmatpush1.msra.mxu0 0.0
      %1651 = vmatprep.subr.mxu0 0.0
      %1652 = vmatpush1.msra.mxu0 0.0
      %1653 = vmatprep.subr.mxu0 0.0
      %1654 = vmatpush1.msra.mxu0 0.0
      %1655 = vmatprep.subr.mxu0 0.0
      %1656 = vmatpush1.msra.mxu0 0.0
      %1657 = vmatprep.subr.mxu0 0.0
      %1658 = vmatpush1.msra.mxu0 0.0
      %1659 = vmatprep.subr.mxu0 0.0
      %1660 = vmatpush1.msra.mxu0 0.0
      %1661 = vmatprep.subr.mxu0 0.0
      %1662 = vmatpush1.msra.mxu0 0.0
      %1663 = vmatprep.subr.mxu0 0.0
      %1664 = vmatpush1.msra.mxu0 0.0
      %1665 = vmatprep.subr.mxu0 0.0
      %1666 = vmatpush1.msra.mxu0 0.0
      %1667 = vmatprep.subr.mxu0 0.0
      %1668 = vmatpush1.msra.mxu0 0.0
      %1669 = vmatprep.subr.mxu0 0.0
      %1670 = vmatpush1.msra.mxu0 0.0
      %1671 = vmatprep.subr.mxu0 0.0
      %1672 = vmatpush1.msra.mxu0 0.0
      %1673 = vmatprep.subr.mxu0 0.0
      %1674 = vmatpush1.msra.mxu0 0.0
      %1675 = vmatprep.subr.mxu0 0.0
      %1676 = vmatpush1.msra.mxu0 0.0
      %1677 = vmatprep.subr.mxu0 0.0
      %1678 = vmatpush1.msra.mxu0 0.0
      %1679 = vmatprep.subr.mxu0 0.0
      %1680 = vmatpush1.msra.mxu0 0.0
      %1681 = vmatprep.subr.mxu0 0.0
      %1682 = vmatpush1.msra.mxu0 0.0
      %1683 = vmatprep.subr.mxu0 0.0
      %1684 = vmatpush1.msra.mxu0 0.0
      %1685 = vmatprep.subr.mxu0 0.0
      %1686 = vmatpush1.msra.mxu0 0.0
      %1687 = vmatprep.subr.mxu0 0.0
      %1688 = vmatpush1.msra.mxu0 0.0
      %1689 = vmatprep.subr.mxu0 0.0
      %1690 = vmatpush1.msra.mxu0 0.0
      %1691 = vmatprep.subr.mxu0 0.0
      %1692 = vmatpush1.msra.mxu0 0.0
      %1693 = vmatprep.subr.mxu0 0.0
      %1694 = vmatpush1.msra.mxu0 0.0
      %1695 = vmatprep.subr.mxu0 0.0
      %1696 = vmatpush1.msra.mxu0 0.0
      %1697 = vmatprep.subr.mxu0 0.0
      %1698 = vmatpush1.msra.mxu0 0.0
      %1699 = vmatprep.subr.mxu0 0.0
      %1700 = vmatpush1.msra.mxu0 0.0
      %1701 = vmatprep.mubr.f32.mxu0 0.0
      %1702 = vmatmul.mubr.f32.gmra.mrb[0].mxu0 %v1632
      %v1703 = vpop.f32.mrb[0].mxu0
      %v1704 = vadd.f32 %v1624, %v1703
      %v1705 = vpop.f32.mrb[0].mxu0
      %1706 = vmatprep.mubr.f32.mxu0 0.0
      %1707 = vmatmul.mubr.f32.gmra.mrb[0].mxu0 %v1635
      %v1708 = vpop.f32.mrb[0].mxu0
      %v1709 = vadd.f32 %v1629, %v1708
      %v1710 = vpop.f32.mrb[0].mxu0
      %1711 = vdwg.mxu0
      %v1712 = vmax.f32 %v1704, 0.0
      %v1713 = vmax.f32 %v1709, 0.0
      %v1714 = vld [vmem:[%s16] sm:$0xff]
      %v1715 = vld [vmem:[%s16 + $0x8] sm:$0xff]
      %v1716 = vld [vmem:[%s17] sm:$0xff]
      %v1717 = vld [vmem:[%s17 + $0x8] sm:$0xff]
      %1720 = vrot.lane.b32.xlu0 %v1712, 1
      %v1721 = vpop.permute.xlu0 %1720
      %1722 = vrot.lane.b32.xlu0 %v1713, 1
      %v1723 = vpop.permute.xlu0 %1722
      %v1726 = vsel %vm774, 0.0, %v1721
      %v1727 = vsel %vm774, 0.0, %v1723
      %v1728 = vsel %vm1519, %v1726, 0.0
      %v1729 = vsel %vm1519, %v1727, 0.0
      %1730 = vrot.lane.b32.xlu0 %v1712, 127
      %v1731 = vpop.permute.xlu0 %1730
      %1732 = vrot.lane.b32.xlu0 %v1713, 127
      %v1733 = vpop.permute.xlu0 %1732
      %v1736 = vsel %vm1525, %v1731, 0.0
      %v1737 = vsel %vm1525, %v1733, 0.0
      %v1738 = vsel %vm1528, %v1736, 0.0
      %v1739 = vsel %vm1528, %v1737, 0.0
      %1741 = vset.pattern.permute.xlu0 4
      %1742 = vperm.xlu0 %1741, %v1714
      %v1743 = vpop.permute.xlu0 %1742
      %1746 = vset.pattern.permute.xlu0 4
      %1747 = vperm.xlu0 %1746, %v1715
      %v1748 = vpop.permute.xlu0 %1747
      %v1750 = vmul.f32 %v1712, %v1743
      %v1751 = vmul.f32 %v1713, %v1748
      %1753 = vset.pattern.permute.xlu0 0
      %1754 = vperm.xlu0 %1753, %v1716
      %v1755 = vpop.permute.xlu0 %1754
      %1758 = vset.pattern.permute.xlu0 0
      %1759 = vperm.xlu0 %1758, %v1717
      %v1760 = vpop.permute.xlu0 %1759
      %v1762 = vadd.f32 %v1750, %v1755
      %v1763 = vadd.f32 %v1751, %v1760
      %1766 = vrot.lane.b32.xlu0 %v1728, 8
      %v1767 = vpop.permute.xlu0 %1766
      %1768 = vrot.lane.b32.xlu0 %v1729, 8
      %v1769 = vpop.permute.xlu0 %1768
      %v1772 = vsel %vm1222, 0.0, %v1767
      %v1773 = vsel %vm1222, 0.0, %v1769
      %1774 = vset.pattern.permute.xlu0 0
      %1775 = vperm.xlu0 %1774, %v1714
      %v1776 = vpop.permute.xlu0 %1775
      %1778 = vset.pattern.permute.xlu0 0
      %1779 = vperm.xlu0 %1778, %v1715
      %v1780 = vpop.permute.xlu0 %1779
      %v1782 = vmul.f32 %v1772, %v1776
      %v1783 = vmul.f32 %v1773, %v1780
      %v1784 = vadd.f32 %v1762, %v1782
      %v1785 = vadd.f32 %v1763, %v1783
      %1786 = vrot.lane.b32.xlu0 %v1712, 8
      %v1787 = vpop.permute.xlu0 %1786
      %1788 = vrot.lane.b32.xlu0 %v1713, 8
      %v1789 = vpop.permute.xlu0 %1788
      %v1792 = vsel %vm1222, 0.0, %v1787
      %v1793 = vsel %vm1222, 0.0, %v1789
      %1794 = vset.pattern.permute.xlu0 1
      %1795 = vperm.xlu0 %1794, %v1714
      %v1796 = vpop.permute.xlu0 %1795
      %1798 = vset.pattern.permute.xlu0 1
      %1799 = vperm.xlu0 %1798, %v1715
      %v1800 = vpop.permute.xlu0 %1799
      %v1802 = vmul.f32 %v1792, %v1796
      %v1803 = vmul.f32 %v1793, %v1800
      %v1804 = vadd.f32 %v1784, %v1802
      %v1805 = vadd.f32 %v1785, %v1803
      %1808 = vrot.lane.b32.xlu0 %v1738, 8
      %v1809 = vpop.permute.xlu0 %1808
      %1810 = vrot.lane.b32.xlu0 %v1739, 8
      %v1811 = vpop.permute.xlu0 %1810
      %v1814 = vsel %vm1222, 0.0, %v1809
      %v1815 = vsel %vm1222, 0.0, %v1811
      %1816 = vset.pattern.permute.xlu0 2
      %1817 = vperm.xlu0 %1816, %v1714
      %v1818 = vpop.permute.xlu0 %1817
      %1820 = vset.pattern.permute.xlu0 2
      %1821 = vperm.xlu0 %1820, %v1715
      %v1822 = vpop.permute.xlu0 %1821
      %v1824 = vmul.f32 %v1814, %v1818
      %v1825 = vmul.f32 %v1815, %v1822
      %v1826 = vadd.f32 %v1804, %v1824
      %v1827 = vadd.f32 %v1805, %v1825
      %1828 = vset.pattern.permute.xlu0 3
      %1829 = vperm.xlu0 %1828, %v1714
      %v1830 = vpop.permute.xlu0 %1829
      %1832 = vset.pattern.permute.xlu0 3
      %1833 = vperm.xlu0 %1832, %v1715
      %v1834 = vpop.permute.xlu0 %1833
      %v1836 = vmul.f32 %v1728, %v1830
      %v1837 = vmul.f32 %v1729, %v1834
      %v1838 = vadd.f32 %v1826, %v1836
      %v1839 = vadd.f32 %v1827, %v1837
      %1840 = vset.pattern.permute.xlu0 5
      %1841 = vperm.xlu0 %1840, %v1714
      %v1842 = vpop.permute.xlu0 %1841
      %1844 = vset.pattern.permute.xlu0 5
      %1845 = vperm.xlu0 %1844, %v1715
      %v1846 = vpop.permute.xlu0 %1845
      %v1848 = vmul.f32 %v1738, %v1842
      %v1849 = vmul.f32 %v1739, %v1846
      %v1850 = vadd.f32 %v1838, %v1848
      %v1851 = vadd.f32 %v1839, %v1849
      %1852 = vrot.lane.b32.xlu0 %v1728, 120
      %v1853 = vpop.permute.xlu0 %1852
      %1854 = vrot.lane.b32.xlu0 %v1729, 120
      %v1855 = vpop.permute.xlu0 %1854
      %v1858 = vsel %vm1589, %v1853, 0.0
      %v1859 = vsel %vm1589, %v1855, 0.0
      %1860 = vset.pattern.permute.xlu0 6
      %1861 = vperm.xlu0 %1860, %v1714
      %v1862 = vpop.permute.xlu0 %1861
      %1864 = vset.pattern.permute.xlu0 6
      %1865 = vperm.xlu0 %1864, %v1715
      %v1866 = vpop.permute.xlu0 %1865
      %v1868 = vmul.f32 %v1858, %v1862
      %v1869 = vmul.f32 %v1859, %v1866
      %v1870 = vadd.f32 %v1850, %v1868
      %v1871 = vadd.f32 %v1851, %v1869
      %1872 = vrot.lane.b32.xlu0 %v1712, 120
      %v1873 = vpop.permute.xlu0 %1872
      %1874 = vrot.lane.b32.xlu0 %v1713, 120
      %v1875 = vpop.permute.xlu0 %1874
      %v1878 = vsel %vm1589, %v1873, 0.0
      %v1879 = vsel %vm1589, %v1875, 0.0
      %1880 = vset.pattern.permute.xlu0 7
      %1881 = vperm.xlu0 %1880, %v1714
      %v1882 = vpop.permute.xlu0 %1881
      %1884 = vset.pattern.permute.xlu0 7
      %1885 = vperm.xlu0 %1884, %v1715
      %v1886 = vpop.permute.xlu0 %1885
      %v1888 = vmul.f32 %v1878, %v1882
      %v1889 = vmul.f32 %v1879, %v1886
      %v1890 = vadd.f32 %v1870, %v1888
      %v1891 = vadd.f32 %v1871, %v1889
      %1892 = vrot.lane.b32.xlu0 %v1738, 120
      %v1893 = vpop.permute.xlu0 %1892
      %1894 = vrot.lane.b32.xlu0 %v1739, 120
      %v1895 = vpop.permute.xlu0 %1894
      %v1898 = vsel %vm1589, %v1893, 0.0
      %v1899 = vsel %vm1589, %v1895, 0.0
      %1900 = vset.pattern.permute.xlu0 8
      %1901 = vperm.xlu0 %1900, %v1714
      %v1902 = vpop.permute.xlu0 %1901
      %1904 = vset.pattern.permute.xlu0 8
      %1905 = vperm.xlu0 %1904, %v1715
      %v1906 = vpop.permute.xlu0 %1905
      %v1908 = vmul.f32 %v1898, %v1902
      %v1909 = vmul.f32 %v1899, %v1906
      %v1910 = vadd.f32 %v1890, %v1908
      %v1911 = vadd.f32 %v1891, %v1909
      %v1912 = vld [vmem:[%s18] sm:$0xff]
      %v1913 = vld [vmem:[%s18 + $0x8] sm:$0xff]
      %v1914 = vld [vmem:[%s19] sm:$0xff]
      %v1915 = vld [vmem:[%s19 + $0x8] sm:$0xff]
      %1917 = vset.pattern.permute.xlu0 0
      %1918 = vperm.xlu0 %1917, %v1914
      %v1919 = vpop.permute.xlu0 %1918
      %1922 = vset.pattern.permute.xlu0 0
      %1923 = vperm.xlu0 %1922, %v1915
      %v1924 = vpop.permute.xlu0 %1923
      %v1927 = vsel %vm834, %v1912, 0
      %v1930 = vsel %vm834, %v1913, 0
      %1932 = vmatprep.subr.mxu0 0.0
      %1933 = vmatpush1.msra.mxu0 %v1910
      %1934 = vmatprep.subr.mxu0 0.0
      %1935 = vmatpush1.msra.mxu0 %v1911
      %1936 = vmatprep.subr.mxu0 0.0
      %1937 = vmatpush1.msra.mxu0 0.0
      %1938 = vmatprep.subr.mxu0 0.0
      %1939 = vmatpush1.msra.mxu0 0.0
      %1940 = vmatprep.subr.mxu0 0.0
      %1941 = vmatpush1.msra.mxu0 0.0
      %1942 = vmatprep.subr.mxu0 0.0
      %1943 = vmatpush1.msra.mxu0 0.0
      %1944 = vmatprep.subr.mxu0 0.0
      %1945 = vmatpush1.msra.mxu0 0.0
      %1946 = vmatprep.subr.mxu0 0.0
      %1947 = vmatpush1.msra.mxu0 0.0
      %1948 = vmatprep.subr.mxu0 0.0
      %1949 = vmatpush1.msra.mxu0 0.0
      %1950 = vmatprep.subr.mxu0 0.0
      %1951 = vmatpush1.msra.mxu0 0.0
      %1952 = vmatprep.subr.mxu0 0.0
      %1953 = vmatpush1.msra.mxu0 0.0
      %1954 = vmatprep.subr.mxu0 0.0
      %1955 = vmatpush1.msra.mxu0 0.0
      %1956 = vmatprep.subr.mxu0 0.0
      %1957 = vmatpush1.msra.mxu0 0.0
      %1958 = vmatprep.subr.mxu0 0.0
      %1959 = vmatpush1.msra.mxu0 0.0
      %1960 = vmatprep.subr.mxu0 0.0
      %1961 = vmatpush1.msra.mxu0 0.0
      %1962 = vmatprep.subr.mxu0 0.0
      %1963 = vmatpush1.msra.mxu0 0.0
      %1964 = vmatprep.subr.mxu0 0.0
      %1965 = vmatpush1.msra.mxu0 0.0
      %1966 = vmatprep.subr.mxu0 0.0
      %1967 = vmatpush1.msra.mxu0 0.0
      %1968 = vmatprep.subr.mxu0 0.0
      %1969 = vmatpush1.msra.mxu0 0.0
      %1970 = vmatprep.subr.mxu0 0.0
      %1971 = vmatpush1.msra.mxu0 0.0
      %1972 = vmatprep.subr.mxu0 0.0
      %1973 = vmatpush1.msra.mxu0 0.0
      %1974 = vmatprep.subr.mxu0 0.0
      %1975 = vmatpush1.msra.mxu0 0.0
      %1976 = vmatprep.subr.mxu0 0.0
      %1977 = vmatpush1.msra.mxu0 0.0
      %1978 = vmatprep.subr.mxu0 0.0
      %1979 = vmatpush1.msra.mxu0 0.0
      %1980 = vmatprep.subr.mxu0 0.0
      %1981 = vmatpush1.msra.mxu0 0.0
      %1982 = vmatprep.subr.mxu0 0.0
      %1983 = vmatpush1.msra.mxu0 0.0
      %1984 = vmatprep.subr.mxu0 0.0
      %1985 = vmatpush1.msra.mxu0 0.0
      %1986 = vmatprep.subr.mxu0 0.0
      %1987 = vmatpush1.msra.mxu0 0.0
      %1988 = vmatprep.subr.mxu0 0.0
      %1989 = vmatpush1.msra.mxu0 0.0
      %1990 = vmatprep.subr.mxu0 0.0
      %1991 = vmatpush1.msra.mxu0 0.0
      %1992 = vmatprep.subr.mxu0 0.0
      %1993 = vmatpush1.msra.mxu0 0.0
      %1994 = vmatprep.subr.mxu0 0.0
      %1995 = vmatpush1.msra.mxu0 0.0
      %1996 = vmatprep.mubr.f32.mxu0 0.0
      %1997 = vmatmul.mubr.f32.gmra.mrb[0].mxu0 %v1927
      %v1998 = vpop.f32.mrb[0].mxu0
      %v1999 = vadd.f32 %v1919, %v1998
      %v2000 = vpop.f32.mrb[0].mxu0
      %2001 = vmatprep.mubr.f32.mxu0 0.0
      %2002 = vmatmul.mubr.f32.gmra.mrb[0].mxu0 %v1930
      %v2003 = vpop.f32.mrb[0].mxu0
      %v2004 = vadd.f32 %v1924, %v2003
      %v2005 = vpop.f32.mrb[0].mxu0
      %2006 = vdwg.mxu0
      %v2007 = vmax.f32 %v1999, 0.0
      %v2008 = vmax.f32 %v2004, 0.0
      %vm2009 = vcmask 523264
      %v2010 = vsel %vm2009, %v2007, 0.0
      %2011 = vadd.xlane.f32.xlu0 %v2010
      %v2012 = vpop.xlane.xlu0 %2011
      %v2013 = vsel %vm2009, %v2008, 0.0
      %2014 = vadd.xlane.f32.xlu0 %v2013
      %v2015 = vpop.xlane.xlu0 %2014
      %v2016 = vmul.f32 %v2012, 0.015625
      %v2017 = vmul.f32 %v2015, 0.015625
      %2018 = vst.msk [vmem:[%s629] sm:$0xff] %vm774, %v2016
      %2019 = vst.msk [vmem:[%s629 + $0x8] sm:$0xff] %vm774, %v2017
      %p2020 = scmp.lt.s32.totalorder %s31, 1
      %s2021 = scalar_select %p2020, %s31, 1
      %s2022 = smul.addr %s2021, 2
      %s2023 = smul.addr %s2022, 8
      %s2024 = scalar_lea.vmem %s20, %s2023
      // Predicated region
      $region101: #{tpu_custom_call.1} parent=99 // pred_check
        %p2025 = pneg %p474
      $region102: #{tpu_custom_call.1} parent=99 // pred_check_branch
        %2027 = sbr.rel (%p2025) target = $region104
      $region103: #{tpu_custom_call.1} parent=99 // pred_region
        _
      $region104: #{tpu_custom_call.1} parent=99 // pred_fallthru
        _
    $region100: #{tpu_custom_call.1} parent=5 // pred_fallthru
      _
    %p2028 = scmp.le.s32.totalorder 2, %s26
    // Predicated region
    $region105: #{tpu_custom_call.1} parent=5 // pred_check
      %p2029 = pneg %p2028
    $region106: #{tpu_custom_call.1} parent=5 // pred_check_branch
      %2031 = sbr.rel (%p2029) target = $region108
    $region107: #{tpu_custom_call.1} parent=5 // pred_region
      %s2032 = ssub.s32 %s26, 2
      // Predicated region
      $region109: #{tpu_custom_call.1} parent=107 // pred_check
        %p2033 = pneg %p480
      $region110: #{tpu_custom_call.1} parent=107 // pred_check_branch
        %2035 = sbr.rel (%p2033) target = $region112
      $region111: #{tpu_custom_call.1} parent=107 // pred_region
        %p2036 = scmp.lt.s32.totalorder %s32, 1
        %s2037 = scalar_select %p2036, %s32, 1
        %s2038 = smul.addr %s2037, 2
        %s2039 = smul.addr %s2038, 8
        %s2040 = scalar_lea.vmem %s20, %s2039
      $region112: #{tpu_custom_call.1} parent=107 // pred_fallthru
        _
    $region108: #{tpu_custom_call.1} parent=5 // pred_fallthru
      _
  $region6: #{tpu_custom_call.1} parent=0 // loop_footer
    %s30 = sadd.s32 1, %s26
  $region7: #{tpu_custom_call.1} parent=0 // loop_footer_branch
    %25 = sbr.rel target = $region3
  $region8: #{tpu_custom_call.1} parent=0 // loop_exit
    _

</llo_original>
